<compile_context>
chip_gen: v7x
topology: tpu7x:2x2x1
jax: 0.10.0
libtpu: 0.0.40
codegen_flags: <defaults>
</compile_context>

<pallas_src>
import functools

import jax
import jax.numpy as jnp
from jax.experimental import pallas as pl
from jax.experimental.pallas import tpu as pltpu

H = W = 7          # MiniGrid observation spatial size
C_IN = 3
N_ACT = 7          # MiniGrid action-space size
EMBED = ((H - 1) // 2 - 2) * ((W - 1) // 2 - 2) * 64   # = 64
OUT_ROWS = 8       # sublane-padded logits rows written by the kernel
NEG_BIG = -1e9     # bias for the padding logit row (exp underflows to 0)


def _round_up(x, m):
    return (x + m - 1) // m * m


def encoder_kernel(p1_ref,
                   w1_ref, b1_ref,
                   w2_ref, b2_ref,
                   w3_ref, b3_ref,
                   wl1_ref, bl1_ref,
                   wl2_ref, bl2_ref,
                   out_ref, *, bt):
    f32 = jnp.float32

    # ---- Conv2d(3,16,(2,2)) + ReLU: ONE matmul over K = 12 -----------------
    # p1 columns are c = p*bt + j (p = oh*6 + ow, j = batch-in-tile),
    # rows are k = (dh*2 + dw)*3 + ci.
    p1 = p1_ref[...].astype(f32)                               # (12, 36*bt)
    h1 = jnp.dot(w1_ref[...], p1, preferred_element_type=f32) + b1_ref[...]
    h1 = jnp.maximum(h1, 0.0)                                  # (16, 36*bt)

    def conv1_pos(p):                       # conv1 output at position p
        return h1[:, p * bt:(p + 1) * bt]   # (16, bt), 128-aligned lane slice

    # ---- MaxPool2d((2,2)): 6x6 -> 3x3, elementwise max of lane slices ------
    pooled = []                             # index q = ph*3 + pw
    for ph in range(3):
        for pw in range(3):
            m = jnp.maximum(conv1_pos((2 * ph) * 6 + 2 * pw),
                            conv1_pos((2 * ph) * 6 + 2 * pw + 1))
            m = jnp.maximum(m, conv1_pos((2 * ph + 1) * 6 + 2 * pw))
            m = jnp.maximum(m, conv1_pos((2 * ph + 1) * 6 + 2 * pw + 1))
            pooled.append(m)                # (16, bt)

    # ---- Conv2d(16,32,(2,2)) + ReLU: 4 positions, results feed p3 directly --
    h2 = []
    for oh in range(2):
        for ow in range(2):
            patch = jnp.concatenate(        # (64, bt), 16-row-aligned concat
                [pooled[(oh + dh) * 3 + (ow + dw)]
                 for dh in range(2) for dw in range(2)], axis=0)
            y = jnp.dot(w2_ref[...], patch, preferred_element_type=f32) + b2_ref[...]
            h2.append(jnp.maximum(y, 0.0))  # (32, bt)

    # ---- Conv2d(32,64,(2,2)) + ReLU: single position, K = 128 ---------------
    p3 = jnp.concatenate(h2, axis=0)                           # (128, bt)
    feat = jnp.dot(w3_ref[...], p3, preferred_element_type=f32) + b3_ref[...]
    feat = jnp.maximum(feat, 0.0)                              # (64, bt) flatten

    # ---- Linear(64, 64) + Tanh ----------------------------------------------
    hid = jnp.tanh(jnp.dot(wl1_ref[...], feat, preferred_element_type=f32)
                   + bl1_ref[...])                             # (64, bt)

    # ---- Linear(64, n_act) (sublane-padded to 8 rows) + log_softmax ---------
    # Padding row carries bias -1e9 -> exp underflows to 0, softmax unchanged.
    logits = jnp.dot(wl2_ref[...], hid, preferred_element_type=f32) + bl2_ref[...]
    m = jnp.max(logits, axis=0, keepdims=True)
    z = logits - m
    lse = jnp.log(jnp.sum(jnp.exp(z), axis=0, keepdims=True))
    out_ref[...] = z - lse                                     # (8, bt)


def encoder_forward(obs, params, *, b_tile=512):
    """obs: (B, 7, 7, 3) NHWC float.  Returns (B, N_ACT) log-probs."""
    B = obs.shape[0]
    (w1, b1, w2, b2, w3, b3, wl1, bl1, wl2, bl2) = params
    f32 = jnp.float32

    # Batch tile = lane width inside the kernel: always a multiple of 128.
    bt = _round_up(max(128, min(b_tile, B)), 128)
    Bp = _round_up(B, bt)
    nb = Bp // bt

    x = obs.astype(f32)
    if Bp != B:
        x = jnp.pad(x, ((0, Bp - B), (0, 0), (0, 0), (0, 0)))

    # Transposed (lane-dense) im2col for conv1, cast to bf16 (halves input DMA):
    #   p1[i, k, p*bt + j] = obs[i*bt + j, oh+dh, ow+dw, ci]
    #   with p = oh*6 + ow, k = (dh*2 + dw)*3 + ci.
    cols = [x[:, dh:dh + 6, dw:dw + 6, :] for dh in range(2) for dw in range(2)]
    p1 = jnp.stack(cols, axis=3).reshape(Bp, 36, 12)           # (Bp, p, k)
    p1 = (p1.reshape(nb, bt, 36, 12)
            .transpose(0, 3, 2, 1)                             # (nb, k, p, j)
            .reshape(nb, 12, 36 * bt)
            .astype(jnp.bfloat16))

    # Repack weights for the transposed (channels-on-sublanes) dataflow.
    w1t = w1.reshape(2 * 2 * C_IN, 16).T.astype(f32)           # (16, 12)
    w2t = w2.reshape(2 * 2 * 16, 32).T.astype(f32)             # (32, 64)
    w3t = w3.reshape(2 * 2 * 32, 64).T.astype(f32)             # (64, 128)
    wl1t = wl1.T.astype(f32)                                   # (64, 64) (out,in)
    wl2t = jnp.zeros((OUT_ROWS, 64), f32).at[:N_ACT, :].set(wl2.T)
    b1c = b1.reshape(16, 1).astype(f32)
    b2c = b2.reshape(32, 1).astype(f32)
    b3c = b3.reshape(64, 1).astype(f32)
    bl1c = bl1.reshape(64, 1).astype(f32)
    bl2c = jnp.full((OUT_ROWS, 1), NEG_BIG, f32).at[:N_ACT, :].set(
        bl2.reshape(N_ACT, 1))

    kernel = functools.partial(encoder_kernel, bt=bt)

    flops = 2 * Bp * (36 * 12 * 16 + 4 * 64 * 32 + 128 * 64 + 64 * 64
                      + 64 * OUT_ROWS)
    bytes_accessed = (Bp * (36 * 12 * 2 + OUT_ROWS * 4)
                      + 4 * (16 * 12 + 32 * 64 + 64 * 128 + 64 * 64
                             + OUT_ROWS * 64 + 16 + 32 + 64 + 64 + OUT_ROWS))
    transcendentals = Bp * (64 + OUT_ROWS + 1)                 # tanh + exp + log

    out = pl.pallas_call(
        kernel,
        out_shape=jax.ShapeDtypeStruct((OUT_ROWS, Bp), jnp.float32),
        grid=(nb,),
        in_specs=[
            pl.BlockSpec((None, 12, 36 * bt), lambda i: (i, 0, 0)),
            pl.BlockSpec((16, 12), lambda i: (0, 0)),
            pl.BlockSpec((16, 1), lambda i: (0, 0)),
            pl.BlockSpec((32, 64), lambda i: (0, 0)),
            pl.BlockSpec((32, 1), lambda i: (0, 0)),
            pl.BlockSpec((64, 128), lambda i: (0, 0)),
            pl.BlockSpec((64, 1), lambda i: (0, 0)),
            pl.BlockSpec((64, 64), lambda i: (0, 0)),
            pl.BlockSpec((64, 1), lambda i: (0, 0)),
            pl.BlockSpec((OUT_ROWS, 64), lambda i: (0, 0)),
            pl.BlockSpec((OUT_ROWS, 1), lambda i: (0, 0)),
        ],
        out_specs=pl.BlockSpec((OUT_ROWS, bt), lambda i: (0, i)),
        compiler_params=pltpu.CompilerParams(
            dimension_semantics=("parallel",),
            allow_input_fusion=[True] + [False] * 10),
        cost_estimate=pl.CostEstimate(
            flops=flops, transcendentals=transcendentals,
            bytes_accessed=bytes_accessed),
    )(p1, w1t, b1c, w2t, b2c, w3t, b3c, wl1t, bl1c, wl2t, bl2c)

    return out[:N_ACT, :B].T


def init_params(key):
    """Deterministic xavier-uniform weights (like the PyTorch init) + default-style biases."""
    ks = jax.random.split(key, 10)

    def xavier(k, shape, fan_in, fan_out):
        bound = (6.0 / (fan_in + fan_out)) ** 0.5
        return jax.random.uniform(k, shape, jnp.float32, -bound, bound)

    def bias(k, shape, fan_in):
        bound = 1.0 / (fan_in ** 0.5)
        return jax.random.uniform(k, shape, jnp.float32, -bound, bound)

    # Conv weights generated in PyTorch layout (Cout, Cin, kh, kw),
    # then repacked to (kh, kw, Cin, Cout).
    w1 = xavier(ks[0], (16, 3, 2, 2), 3 * 4, 16 * 4).transpose(2, 3, 1, 0)
    b1 = bias(ks[1], (1, 16), 3 * 4)
    w2 = xavier(ks[2], (32, 16, 2, 2), 16 * 4, 32 * 4).transpose(2, 3, 1, 0)
    b2 = bias(ks[3], (1, 32), 16 * 4)
    w3 = xavier(ks[4], (64, 32, 2, 2), 32 * 4, 64 * 4).transpose(2, 3, 1, 0)
    b3 = bias(ks[5], (1, 64), 32 * 4)
    # Linear weights generated as (out, in) like nn.Linear, then transposed to (in, out).
    wl1 = xavier(ks[6], (64, EMBED), EMBED, 64).T
    bl1 = bias(ks[7], (1, 64), EMBED)
    wl2 = xavier(ks[8], (N_ACT, 64), 64, N_ACT).T
    bl2 = bias(ks[9], (1, N_ACT), 64)
    return (w1, b1, w2, b2, w3, b3, wl1, bl1, wl2, bl2)


def reference_forward(obs, params):
    """Pure-JAX reference mirroring the PyTorch forward, for verification."""
    (w1, b1, w2, b2, w3, b3, wl1, bl1, wl2, bl2) = params
    x = obs.astype(jnp.float32)

    def conv(x, w, b):  # w: (kh, kw, Cin, Cout)
        y = jax.lax.conv_general_dilated(
            x, w, window_strides=(1, 1), padding="VALID",
            dimension_numbers=("NHWC", "HWIO", "NHWC"))
        return jnp.maximum(y + b.reshape(1, 1, 1, -1), 0.0)

    x = conv(x, w1, b1)
    x = jax.lax.reduce_window(x, -jnp.inf, jax.lax.max,
                              (1, 2, 2, 1), (1, 2, 2, 1), "VALID")
    x = conv(x, w2, b2)
    x = conv(x, w3, b3)
    x = x.reshape(x.shape[0], -1)
    x = jnp.tanh(x @ wl1 + bl1)
    logits = x @ wl2 + bl2
    return jax.nn.log_softmax(logits, axis=1)


if __name__ == "__main__":
    key = jax.random.PRNGKey(0)
    pkey, okey, okey2 = jax.random.split(key, 3)
    params = init_params(pkey)

    # MiniGrid-style integer-valued observations (bf16 cast is exact), batch=2.
    obs = jax.random.randint(okey, (2, H, W, C_IN), 0, 11).astype(jnp.float32)
    out = jax.block_until_ready(encoder_forward(obs, params))
    ref = reference_forward(obs, params)
    assert out.shape == (2, N_ACT)
    assert bool(jnp.allclose(out, ref, atol=1e-3, rtol=1e-3)), (out, ref)

    # Also exercise multi-tile grid + batch padding path (nb = 3 tiles).
    obs_big = jax.random.randint(okey2, (300, H, W, C_IN), 0, 11).astype(jnp.float32)
    out_big = jax.block_until_ready(encoder_forward(obs_big, params, b_tile=128))
    ref_big = reference_forward(obs_big, params)
    assert out_big.shape == (300, N_ACT)
    assert bool(jnp.allclose(out_big, ref_big, atol=1e-3, rtol=1e-3))

    # TODO(synk): the Categorical distribution object (sampling / log_prob of
    # given actions) is not a kernel concern; the kernel returns its log-probs.
    print("KERNEL_OK")
</pallas_src>

<mosaic_0001>
module attributes {stable_mosaic.version = 11 : i64} {
  func.func @encoder_kernel(%arg0: i32, %arg1: memref<1x12x4608xbf16, #tpu.memory_space<vmem>>, %arg2: memref<16x12xf32, #tpu.memory_space<vmem>>, %arg3: memref<16x1xf32, #tpu.memory_space<vmem>>, %arg4: memref<32x64xf32, #tpu.memory_space<vmem>>, %arg5: memref<32x1xf32, #tpu.memory_space<vmem>>, %arg6: memref<64x128xf32, #tpu.memory_space<vmem>>, %arg7: memref<64x1xf32, #tpu.memory_space<vmem>>, %arg8: memref<64x64xf32, #tpu.memory_space<vmem>>, %arg9: memref<64x1xf32, #tpu.memory_space<vmem>>, %arg10: memref<8x64xf32, #tpu.memory_space<vmem>>, %arg11: memref<8x1xf32, #tpu.memory_space<vmem>>, %arg12: memref<8x128xf32, #tpu.memory_space<vmem>>) attributes {dimension_semantics = [#tpu.dimension_semantics<parallel>], iteration_bounds = array<i64: 1>, scalar_prefetch = 0 : i64, scratch_operands = 0 : i64, tpu.core_type = #tpu.core_type<tc>, window_params = [{transform_indices = @transform_0, window_bounds = array<i64: 1, 12, 4608>}, {pipeline_mode = #tpu.pipeline_mode<synchronous>, transform_indices = @transform_1, window_bounds = array<i64: 16, 12>}, {pipeline_mode = #tpu.pipeline_mode<synchronous>, transform_indices = @transform_2, window_bounds = array<i64: 16, 1>}, {pipeline_mode = #tpu.pipeline_mode<synchronous>, transform_indices = @transform_3, window_bounds = array<i64: 32, 64>}, {pipeline_mode = #tpu.pipeline_mode<synchronous>, transform_indices = @transform_4, window_bounds = array<i64: 32, 1>}, {pipeline_mode = #tpu.pipeline_mode<synchronous>, transform_indices = @transform_5, window_bounds = array<i64: 64, 128>}, {pipeline_mode = #tpu.pipeline_mode<synchronous>, transform_indices = @transform_6, window_bounds = array<i64: 64, 1>}, {pipeline_mode = #tpu.pipeline_mode<synchronous>, transform_indices = @transform_7, window_bounds = array<i64: 64, 64>}, {pipeline_mode = #tpu.pipeline_mode<synchronous>, transform_indices = @transform_8, window_bounds = array<i64: 64, 1>}, {pipeline_mode = #tpu.pipeline_mode<synchronous>, transform_indices = @transform_9, window_bounds = array<i64: 8, 64>}, {pipeline_mode = #tpu.pipeline_mode<synchronous>, transform_indices = @transform_10, window_bounds = array<i64: 8, 1>}, {transform_indices = @transform_11, window_bounds = array<i64: 8, 128>}]} {
    %c0 = arith.constant 0 : index
    %c0_0 = arith.constant 0 : index
    %c0_1 = arith.constant 0 : index
    %0 = vector.load %arg1[%c0, %c0_0, %c0_1] : memref<1x12x4608xbf16, #tpu.memory_space<vmem>>, vector<1x12x4608xbf16>
    %1 = vector.shape_cast %0 : vector<1x12x4608xbf16> to vector<12x4608xbf16>
    %2 = arith.extf %1 : vector<12x4608xbf16> to vector<12x4608xf32>
    %c0_2 = arith.constant 0 : index
    %c0_3 = arith.constant 0 : index
    %3 = vector.load %arg2[%c0_2, %c0_3] : memref<16x12xf32, #tpu.memory_space<vmem>>, vector<16x12xf32>
    %cst = arith.constant dense<0.000000e+00> : vector<16x4608xf32>
    %4 = tpu.matmul %3, %2, %cst {dimension_numbers = #tpu.dot_dimension_numbers<[1], [0], [0], [1], [0, 0, 1, 1], [], []>} : vector<16x12xf32>, vector<12x4608xf32>, vector<16x4608xf32> -> vector<16x4608xf32>
    %c0_4 = arith.constant 0 : index
    %c0_5 = arith.constant 0 : index
    %5 = vector.load %arg3[%c0_4, %c0_5] : memref<16x1xf32, #tpu.memory_space<vmem>>, vector<16x1xf32>
    %6 = vector.broadcast %5 : vector<16x1xf32> to vector<16x4608xf32>
    %7 = arith.addf %4, %6 : vector<16x4608xf32>
    %cst_6 = arith.constant 0.000000e+00 : f32
    %8 = vector.broadcast %cst_6 : f32 to vector<16x4608xf32>
    %9 = arith.maximumf %7, %8 : vector<16x4608xf32>
    %10 = vector.extract_strided_slice %9 {offsets = [0, 0], sizes = [16, 128], strides = [1, 1]} : vector<16x4608xf32> to vector<16x128xf32>
    %11 = vector.extract_strided_slice %9 {offsets = [0, 128], sizes = [16, 128], strides = [1, 1]} : vector<16x4608xf32> to vector<16x128xf32>
    %12 = arith.maximumf %10, %11 : vector<16x128xf32>
    %13 = vector.extract_strided_slice %9 {offsets = [0, 768], sizes = [16, 128], strides = [1, 1]} : vector<16x4608xf32> to vector<16x128xf32>
    %14 = arith.maximumf %12, %13 : vector<16x128xf32>
    %15 = vector.extract_strided_slice %9 {offsets = [0, 896], sizes = [16, 128], strides = [1, 1]} : vector<16x4608xf32> to vector<16x128xf32>
    %16 = arith.maximumf %14, %15 : vector<16x128xf32>
    %17 = vector.extract_strided_slice %9 {offsets = [0, 256], sizes = [16, 128], strides = [1, 1]} : vector<16x4608xf32> to vector<16x128xf32>
    %18 = vector.extract_strided_slice %9 {offsets = [0, 384], sizes = [16, 128], strides = [1, 1]} : vector<16x4608xf32> to vector<16x128xf32>
    %19 = arith.maximumf %17, %18 : vector<16x128xf32>
    %20 = vector.extract_strided_slice %9 {offsets = [0, 1024], sizes = [16, 128], strides = [1, 1]} : vector<16x4608xf32> to vector<16x128xf32>
    %21 = arith.maximumf %19, %20 : vector<16x128xf32>
    %22 = vector.extract_strided_slice %9 {offsets = [0, 1152], sizes = [16, 128], strides = [1, 1]} : vector<16x4608xf32> to vector<16x128xf32>
    %23 = arith.maximumf %21, %22 : vector<16x128xf32>
    %24 = vector.extract_strided_slice %9 {offsets = [0, 512], sizes = [16, 128], strides = [1, 1]} : vector<16x4608xf32> to vector<16x128xf32>
    %25 = vector.extract_strided_slice %9 {offsets = [0, 640], sizes = [16, 128], strides = [1, 1]} : vector<16x4608xf32> to vector<16x128xf32>
    %26 = arith.maximumf %24, %25 : vector<16x128xf32>
    %27 = vector.extract_strided_slice %9 {offsets = [0, 1280], sizes = [16, 128], strides = [1, 1]} : vector<16x4608xf32> to vector<16x128xf32>
    %28 = arith.maximumf %26, %27 : vector<16x128xf32>
    %29 = vector.extract_strided_slice %9 {offsets = [0, 1408], sizes = [16, 128], strides = [1, 1]} : vector<16x4608xf32> to vector<16x128xf32>
    %30 = arith.maximumf %28, %29 : vector<16x128xf32>
    %31 = vector.extract_strided_slice %9 {offsets = [0, 1536], sizes = [16, 128], strides = [1, 1]} : vector<16x4608xf32> to vector<16x128xf32>
    %32 = vector.extract_strided_slice %9 {offsets = [0, 1664], sizes = [16, 128], strides = [1, 1]} : vector<16x4608xf32> to vector<16x128xf32>
    %33 = arith.maximumf %31, %32 : vector<16x128xf32>
    %34 = vector.extract_strided_slice %9 {offsets = [0, 2304], sizes = [16, 128], strides = [1, 1]} : vector<16x4608xf32> to vector<16x128xf32>
    %35 = arith.maximumf %33, %34 : vector<16x128xf32>
    %36 = vector.extract_strided_slice %9 {offsets = [0, 2432], sizes = [16, 128], strides = [1, 1]} : vector<16x4608xf32> to vector<16x128xf32>
    %37 = arith.maximumf %35, %36 : vector<16x128xf32>
    %38 = vector.extract_strided_slice %9 {offsets = [0, 1792], sizes = [16, 128], strides = [1, 1]} : vector<16x4608xf32> to vector<16x128xf32>
    %39 = vector.extract_strided_slice %9 {offsets = [0, 1920], sizes = [16, 128], strides = [1, 1]} : vector<16x4608xf32> to vector<16x128xf32>
    %40 = arith.maximumf %38, %39 : vector<16x128xf32>
    %41 = vector.extract_strided_slice %9 {offsets = [0, 2560], sizes = [16, 128], strides = [1, 1]} : vector<16x4608xf32> to vector<16x128xf32>
    %42 = arith.maximumf %40, %41 : vector<16x128xf32>
    %43 = vector.extract_strided_slice %9 {offsets = [0, 2688], sizes = [16, 128], strides = [1, 1]} : vector<16x4608xf32> to vector<16x128xf32>
    %44 = arith.maximumf %42, %43 : vector<16x128xf32>
    %45 = vector.extract_strided_slice %9 {offsets = [0, 2048], sizes = [16, 128], strides = [1, 1]} : vector<16x4608xf32> to vector<16x128xf32>
    %46 = vector.extract_strided_slice %9 {offsets = [0, 2176], sizes = [16, 128], strides = [1, 1]} : vector<16x4608xf32> to vector<16x128xf32>
    %47 = arith.maximumf %45, %46 : vector<16x128xf32>
    %48 = vector.extract_strided_slice %9 {offsets = [0, 2816], sizes = [16, 128], strides = [1, 1]} : vector<16x4608xf32> to vector<16x128xf32>
    %49 = arith.maximumf %47, %48 : vector<16x128xf32>
    %50 = vector.extract_strided_slice %9 {offsets = [0, 2944], sizes = [16, 128], strides = [1, 1]} : vector<16x4608xf32> to vector<16x128xf32>
    %51 = arith.maximumf %49, %50 : vector<16x128xf32>
    %52 = vector.extract_strided_slice %9 {offsets = [0, 3072], sizes = [16, 128], strides = [1, 1]} : vector<16x4608xf32> to vector<16x128xf32>
    %53 = vector.extract_strided_slice %9 {offsets = [0, 3200], sizes = [16, 128], strides = [1, 1]} : vector<16x4608xf32> to vector<16x128xf32>
    %54 = arith.maximumf %52, %53 : vector<16x128xf32>
    %55 = vector.extract_strided_slice %9 {offsets = [0, 3840], sizes = [16, 128], strides = [1, 1]} : vector<16x4608xf32> to vector<16x128xf32>
    %56 = arith.maximumf %54, %55 : vector<16x128xf32>
    %57 = vector.extract_strided_slice %9 {offsets = [0, 3968], sizes = [16, 128], strides = [1, 1]} : vector<16x4608xf32> to vector<16x128xf32>
    %58 = arith.maximumf %56, %57 : vector<16x128xf32>
    %59 = vector.extract_strided_slice %9 {offsets = [0, 3328], sizes = [16, 128], strides = [1, 1]} : vector<16x4608xf32> to vector<16x128xf32>
    %60 = vector.extract_strided_slice %9 {offsets = [0, 3456], sizes = [16, 128], strides = [1, 1]} : vector<16x4608xf32> to vector<16x128xf32>
    %61 = arith.maximumf %59, %60 : vector<16x128xf32>
    %62 = vector.extract_strided_slice %9 {offsets = [0, 4096], sizes = [16, 128], strides = [1, 1]} : vector<16x4608xf32> to vector<16x128xf32>
    %63 = arith.maximumf %61, %62 : vector<16x128xf32>
    %64 = vector.extract_strided_slice %9 {offsets = [0, 4224], sizes = [16, 128], strides = [1, 1]} : vector<16x4608xf32> to vector<16x128xf32>
    %65 = arith.maximumf %63, %64 : vector<16x128xf32>
    %66 = vector.extract_strided_slice %9 {offsets = [0, 3584], sizes = [16, 128], strides = [1, 1]} : vector<16x4608xf32> to vector<16x128xf32>
    %67 = vector.extract_strided_slice %9 {offsets = [0, 3712], sizes = [16, 128], strides = [1, 1]} : vector<16x4608xf32> to vector<16x128xf32>
    %68 = arith.maximumf %66, %67 : vector<16x128xf32>
    %69 = vector.extract_strided_slice %9 {offsets = [0, 4352], sizes = [16, 128], strides = [1, 1]} : vector<16x4608xf32> to vector<16x128xf32>
    %70 = arith.maximumf %68, %69 : vector<16x128xf32>
    %71 = vector.extract_strided_slice %9 {offsets = [0, 4480], sizes = [16, 128], strides = [1, 1]} : vector<16x4608xf32> to vector<16x128xf32>
    %72 = arith.maximumf %70, %71 : vector<16x128xf32>
    %73 = tpu.concatenate %16, %23, %37, %44 in 0 : vector<16x128xf32>, vector<16x128xf32>, vector<16x128xf32>, vector<16x128xf32> -> vector<64x128xf32>
    %c0_7 = arith.constant 0 : index
    %c0_8 = arith.constant 0 : index
    %74 = vector.load %arg4[%c0_7, %c0_8] : memref<32x64xf32, #tpu.memory_space<vmem>>, vector<32x64xf32>
    %cst_9 = arith.constant dense<0.000000e+00> : vector<32x128xf32>
    %75 = tpu.matmul %74, %73, %cst_9 {dimension_numbers = #tpu.dot_dimension_numbers<[1], [0], [0], [1], [0, 0, 1, 1], [], []>} : vector<32x64xf32>, vector<64x128xf32>, vector<32x128xf32> -> vector<32x128xf32>
    %c0_10 = arith.constant 0 : index
    %c0_11 = arith.constant 0 : index
    %76 = vector.load %arg5[%c0_10, %c0_11] : memref<32x1xf32, #tpu.memory_space<vmem>>, vector<32x1xf32>
    %77 = vector.broadcast %76 : vector<32x1xf32> to vector<32x128xf32>
    %78 = arith.addf %75, %77 : vector<32x128xf32>
    %cst_12 = arith.constant 0.000000e+00 : f32
    %79 = vector.broadcast %cst_12 : f32 to vector<32x128xf32>
    %80 = arith.maximumf %78, %79 : vector<32x128xf32>
    %81 = tpu.concatenate %23, %30, %44, %51 in 0 : vector<16x128xf32>, vector<16x128xf32>, vector<16x128xf32>, vector<16x128xf32> -> vector<64x128xf32>
    %c0_13 = arith.constant 0 : index
    %c0_14 = arith.constant 0 : index
    %82 = vector.load %arg4[%c0_13, %c0_14] : memref<32x64xf32, #tpu.memory_space<vmem>>, vector<32x64xf32>
    %cst_15 = arith.constant dense<0.000000e+00> : vector<32x128xf32>
    %83 = tpu.matmul %82, %81, %cst_15 {dimension_numbers = #tpu.dot_dimension_numbers<[1], [0], [0], [1], [0, 0, 1, 1], [], []>} : vector<32x64xf32>, vector<64x128xf32>, vector<32x128xf32> -> vector<32x128xf32>
    %c0_16 = arith.constant 0 : index
    %c0_17 = arith.constant 0 : index
    %84 = vector.load %arg5[%c0_16, %c0_17] : memref<32x1xf32, #tpu.memory_space<vmem>>, vector<32x1xf32>
    %85 = vector.broadcast %84 : vector<32x1xf32> to vector<32x128xf32>
    %86 = arith.addf %83, %85 : vector<32x128xf32>
    %cst_18 = arith.constant 0.000000e+00 : f32
    %87 = vector.broadcast %cst_18 : f32 to vector<32x128xf32>
    %88 = arith.maximumf %86, %87 : vector<32x128xf32>
    %89 = tpu.concatenate %37, %44, %58, %65 in 0 : vector<16x128xf32>, vector<16x128xf32>, vector<16x128xf32>, vector<16x128xf32> -> vector<64x128xf32>
    %c0_19 = arith.constant 0 : index
    %c0_20 = arith.constant 0 : index
    %90 = vector.load %arg4[%c0_19, %c0_20] : memref<32x64xf32, #tpu.memory_space<vmem>>, vector<32x64xf32>
    %cst_21 = arith.constant dense<0.000000e+00> : vector<32x128xf32>
    %91 = tpu.matmul %90, %89, %cst_21 {dimension_numbers = #tpu.dot_dimension_numbers<[1], [0], [0], [1], [0, 0, 1, 1], [], []>} : vector<32x64xf32>, vector<64x128xf32>, vector<32x128xf32> -> vector<32x128xf32>
    %c0_22 = arith.constant 0 : index
    %c0_23 = arith.constant 0 : index
    %92 = vector.load %arg5[%c0_22, %c0_23] : memref<32x1xf32, #tpu.memory_space<vmem>>, vector<32x1xf32>
    %93 = vector.broadcast %92 : vector<32x1xf32> to vector<32x128xf32>
    %94 = arith.addf %91, %93 : vector<32x128xf32>
    %cst_24 = arith.constant 0.000000e+00 : f32
    %95 = vector.broadcast %cst_24 : f32 to vector<32x128xf32>
    %96 = arith.maximumf %94, %95 : vector<32x128xf32>
    %97 = tpu.concatenate %44, %51, %65, %72 in 0 : vector<16x128xf32>, vector<16x128xf32>, vector<16x128xf32>, vector<16x128xf32> -> vector<64x128xf32>
    %c0_25 = arith.constant 0 : index
    %c0_26 = arith.constant 0 : index
    %98 = vector.load %arg4[%c0_25, %c0_26] : memref<32x64xf32, #tpu.memory_space<vmem>>, vector<32x64xf32>
    %cst_27 = arith.constant dense<0.000000e+00> : vector<32x128xf32>
    %99 = tpu.matmul %98, %97, %cst_27 {dimension_numbers = #tpu.dot_dimension_numbers<[1], [0], [0], [1], [0, 0, 1, 1], [], []>} : vector<32x64xf32>, vector<64x128xf32>, vector<32x128xf32> -> vector<32x128xf32>
    %c0_28 = arith.constant 0 : index
    %c0_29 = arith.constant 0 : index
    %100 = vector.load %arg5[%c0_28, %c0_29] : memref<32x1xf32, #tpu.memory_space<vmem>>, vector<32x1xf32>
    %101 = vector.broadcast %100 : vector<32x1xf32> to vector<32x128xf32>
    %102 = arith.addf %99, %101 : vector<32x128xf32>
    %cst_30 = arith.constant 0.000000e+00 : f32
    %103 = vector.broadcast %cst_30 : f32 to vector<32x128xf32>
    %104 = arith.maximumf %102, %103 : vector<32x128xf32>
    %105 = tpu.concatenate %80, %88, %96, %104 in 0 : vector<32x128xf32>, vector<32x128xf32>, vector<32x128xf32>, vector<32x128xf32> -> vector<128x128xf32>
    %c0_31 = arith.constant 0 : index
    %c0_32 = arith.constant 0 : index
    %106 = vector.load %arg6[%c0_31, %c0_32] : memref<64x128xf32, #tpu.memory_space<vmem>>, vector<64x128xf32>
    %cst_33 = arith.constant dense<0.000000e+00> : vector<64x128xf32>
    %107 = tpu.matmul %106, %105, %cst_33 {dimension_numbers = #tpu.dot_dimension_numbers<[1], [0], [0], [1], [0, 0, 1, 1], [], []>} : vector<64x128xf32>, vector<128x128xf32>, vector<64x128xf32> -> vector<64x128xf32>
    %c0_34 = arith.constant 0 : index
    %c0_35 = arith.constant 0 : index
    %108 = vector.load %arg7[%c0_34, %c0_35] : memref<64x1xf32, #tpu.memory_space<vmem>>, vector<64x1xf32>
    %109 = vector.broadcast %108 : vector<64x1xf32> to vector<64x128xf32>
    %110 = arith.addf %107, %109 : vector<64x128xf32>
    %cst_36 = arith.constant 0.000000e+00 : f32
    %111 = vector.broadcast %cst_36 : f32 to vector<64x128xf32>
    %112 = arith.maximumf %110, %111 : vector<64x128xf32>
    %c0_37 = arith.constant 0 : index
    %c0_38 = arith.constant 0 : index
    %113 = vector.load %arg8[%c0_37, %c0_38] : memref<64x64xf32, #tpu.memory_space<vmem>>, vector<64x64xf32>
    %cst_39 = arith.constant dense<0.000000e+00> : vector<64x128xf32>
    %114 = tpu.matmul %113, %112, %cst_39 {dimension_numbers = #tpu.dot_dimension_numbers<[1], [0], [0], [1], [0, 0, 1, 1], [], []>} : vector<64x64xf32>, vector<64x128xf32>, vector<64x128xf32> -> vector<64x128xf32>
    %c0_40 = arith.constant 0 : index
    %c0_41 = arith.constant 0 : index
    %115 = vector.load %arg9[%c0_40, %c0_41] : memref<64x1xf32, #tpu.memory_space<vmem>>, vector<64x1xf32>
    %116 = vector.broadcast %115 : vector<64x1xf32> to vector<64x128xf32>
    %117 = arith.addf %114, %116 : vector<64x128xf32>
    %118 = math.tanh %117 : vector<64x128xf32>
    %c0_42 = arith.constant 0 : index
    %c0_43 = arith.constant 0 : index
    %119 = vector.load %arg10[%c0_42, %c0_43] : memref<8x64xf32, #tpu.memory_space<vmem>>, vector<8x64xf32>
    %cst_44 = arith.constant dense<0.000000e+00> : vector<8x128xf32>
    %120 = tpu.matmul %119, %118, %cst_44 {dimension_numbers = #tpu.dot_dimension_numbers<[1], [0], [0], [1], [0, 0, 1, 1], [], []>} : vector<8x64xf32>, vector<64x128xf32>, vector<8x128xf32> -> vector<8x128xf32>
    %c0_45 = arith.constant 0 : index
    %c0_46 = arith.constant 0 : index
    %121 = vector.load %arg11[%c0_45, %c0_46] : memref<8x1xf32, #tpu.memory_space<vmem>>, vector<8x1xf32>
    %122 = vector.broadcast %121 : vector<8x1xf32> to vector<8x128xf32>
    %123 = arith.addf %120, %122 : vector<8x128xf32>
    %cst_47 = arith.constant dense<0xFF800000> : vector<128xf32>
    %124 = vector.multi_reduction <maximumf>, %123, %cst_47 [0] : vector<8x128xf32> to vector<128xf32>
    %125 = vector.shape_cast %124 : vector<128xf32> to vector<1x128xf32>
    %126 = vector.broadcast %125 : vector<1x128xf32> to vector<8x128xf32>
    %127 = arith.subf %123, %126 : vector<8x128xf32>
    %128 = math.exp %127 : vector<8x128xf32>
    %cst_48 = arith.constant dense<0.000000e+00> : vector<128xf32>
    %129 = vector.multi_reduction <add>, %128, %cst_48 [0] : vector<8x128xf32> to vector<128xf32>
    %130 = vector.shape_cast %129 : vector<128xf32> to vector<1x128xf32>
    %131 = math.log %130 : vector<1x128xf32>
    %132 = vector.broadcast %131 : vector<1x128xf32> to vector<8x128xf32>
    %133 = arith.subf %127, %132 : vector<8x128xf32>
    %c0_49 = arith.constant 0 : index
    %c0_50 = arith.constant 0 : index
    %134 = vector.load %arg12[%c0_49, %c0_50] : memref<8x128xf32, #tpu.memory_space<vmem>>, vector<8x128xf32>
    tpu.vector_store %arg12[%c0_49, %c0_50], %133 {strides = array<i32>} : memref<8x128xf32, #tpu.memory_space<vmem>>, vector<8x128xf32>,
    return
  }
  func.func @transform_0(%arg0: i32) -> (i32, i32, i32) {
    %c0_i32 = arith.constant 0 : i32
    %c0_i32_0 = arith.constant 0 : i32
    %c0_i32_1 = arith.constant 0 : i32
    return %arg0, %c0_i32, %c0_i32_0 : i32, i32, i32
  }
  func.func @transform_1(%arg0: i32) -> (i32, i32) {
    %c0_i32 = arith.constant 0 : i32
    %c0_i32_0 = arith.constant 0 : i32
    %c0_i32_1 = arith.constant 0 : i32
    return %c0_i32, %c0_i32_0 : i32, i32
  }
  func.func @transform_2(%arg0: i32) -> (i32, i32) {
    %c0_i32 = arith.constant 0 : i32
    %c0_i32_0 = arith.constant 0 : i32
    %c0_i32_1 = arith.constant 0 : i32
    return %c0_i32, %c0_i32_0 : i32, i32
  }
  func.func @transform_3(%arg0: i32) -> (i32, i32) {
    %c0_i32 = arith.constant 0 : i32
    %c0_i32_0 = arith.constant 0 : i32
    %c0_i32_1 = arith.constant 0 : i32
    return %c0_i32, %c0_i32_0 : i32, i32
  }
  func.func @transform_4(%arg0: i32) -> (i32, i32) {
    %c0_i32 = arith.constant 0 : i32
    %c0_i32_0 = arith.constant 0 : i32
    %c0_i32_1 = arith.constant 0 : i32
    return %c0_i32, %c0_i32_0 : i32, i32
  }
  func.func @transform_5(%arg0: i32) -> (i32, i32) {
    %c0_i32 = arith.constant 0 : i32
    %c0_i32_0 = arith.constant 0 : i32
    %c0_i32_1 = arith.constant 0 : i32
    return %c0_i32, %c0_i32_0 : i32, i32
  }
  func.func @transform_6(%arg0: i32) -> (i32, i32) {
    %c0_i32 = arith.constant 0 : i32
    %c0_i32_0 = arith.constant 0 : i32
    %c0_i32_1 = arith.constant 0 : i32
    return %c0_i32, %c0_i32_0 : i32, i32
  }
  func.func @transform_7(%arg0: i32) -> (i32, i32) {
    %c0_i32 = arith.constant 0 : i32
    %c0_i32_0 = arith.constant 0 : i32
    %c0_i32_1 = arith.constant 0 : i32
    return %c0_i32, %c0_i32_0 : i32, i32
  }
  func.func @transform_8(%arg0: i32) -> (i32, i32) {
    %c0_i32 = arith.constant 0 : i32
    %c0_i32_0 = arith.constant 0 : i32
    %c0_i32_1 = arith.constant 0 : i32
    return %c0_i32, %c0_i32_0 : i32, i32
  }
  func.func @transform_9(%arg0: i32) -> (i32, i32) {
    %c0_i32 = arith.constant 0 : i32
    %c0_i32_0 = arith.constant 0 : i32
    %c0_i32_1 = arith.constant 0 : i32
    return %c0_i32, %c0_i32_0 : i32, i32
  }
  func.func @transform_10(%arg0: i32) -> (i32, i32) {
    %c0_i32 = arith.constant 0 : i32
    %c0_i32_0 = arith.constant 0 : i32
    %c0_i32_1 = arith.constant 0 : i32
    return %c0_i32, %c0_i32_0 : i32, i32
  }
  func.func @transform_11(%arg0: i32) -> (i32, i32) {
    %c0_i32 = arith.constant 0 : i32
    %c0_i32_0 = arith.constant 0 : i32
    return %c0_i32, %arg0 : i32, i32
  }
}

</mosaic_0001>

<llo_original>
// kernel: tpu_custom_call.1
$region0: #{tpu_custom_call.1}
  #allocation0 [shape = 'u32[]', space=smem, size = 0x4, offset = 0x4, fixed_abs, tag = 'smem constant byte address 0x4 - core index']
  #allocation1 [shape = 'u32[144,128]{1,0:T(1,128)}', space=vmem, size = 0x12000, scoped, tag = 'internal scratch']
  %s0 = inlined_call_operand.hbm [shape: bf16[1,12,4608], index: 0, kind: input, shape index: {}]
  %s1 = inlined_call_operand.vmem [shape: f32[16,12], index: 1, kind: input, shape index: {}]
  %s2 = inlined_call_operand.vmem [shape: f32[16,1], index: 2, kind: input, shape index: {}]
  %s3 = inlined_call_operand.vmem [shape: f32[32,64], index: 3, kind: input, shape index: {}]
  %s4 = inlined_call_operand.vmem [shape: f32[32,1], index: 4, kind: input, shape index: {}]
  %s5 = inlined_call_operand.vmem [shape: f32[64,128], index: 5, kind: input, shape index: {}]
  %s6 = inlined_call_operand.vmem [shape: f32[64,1], index: 6, kind: input, shape index: {}]
  %s7 = inlined_call_operand.vmem [shape: f32[64,64], index: 7, kind: input, shape index: {}]
  %s8 = inlined_call_operand.vmem [shape: f32[64,1], index: 8, kind: input, shape index: {}]
  %s9 = inlined_call_operand.vmem [shape: f32[8,64], index: 9, kind: input, shape index: {}]
  %s10 = inlined_call_operand.vmem [shape: f32[8,1], index: 10, kind: input, shape index: {}]
  %s11 = inlined_call_operand.hbm [shape: f32[8,128], index: 11, kind: output, shape index: {}]
  %s12 = sld [smem:[#allocation0]]
  $region58: #{tpu_custom_call.1} parent=0
    _
  %s14 = ssub.s32 1, %s12
  %s15 = scalar_select 0, %s14, %s12
  $region1: #{tpu_custom_call.1} parent=0
    #allocation2 [shape = 'u8[147456]{0}', space=vmem, size = 0x24000, scoped, tag = 'input window, operand 0, single buffered']
    #allocation3 [shape = 's32[1]{0}', space=sflag, size = 0x4, scoped, tag = 'scoped memory for tpu_custom_call.1']
    #allocation4 [shape = 's32[1]{0}', space=sflag, size = 0x4, scoped, tag = 'scoped memory for tpu_custom_call.1']
    #allocation5 [shape = 'u8[4096]{0}', space=vmem, size = 0x1000, scoped, tag = 'output window, operand 0, single buffered']
    %16 = vsyncpa [#allocation3], 0
    %17 = vsyncpa [#allocation4], 0
    // Predicated region
    $region2: #{tpu_custom_call.1} parent=1 // pred_check
      _
    $region3: #{tpu_custom_call.1} parent=1 // pred_check_branch
      %19 = sbr.rel (0) target = $region5
    $region4: #{tpu_custom_call.1} parent=1 // pred_region
      %s21 = ssub.s32 4608, 4608
      %22 = vsyncadd [#allocation3], %s21
      %s23 = sshll.u32 [#allocation2], 4
      %s24 = int_to_ptr.vmem [resolvable:$true] %s23
      %29 = dma.hbm_to_vmem [thread:$0]  %s0, 4608, %s24, [#allocation3], 2304, 2304, 144
    $region5: #{tpu_custom_call.1} parent=1 // pred_fallthru
      _
    // Predicated region
    $region6: #{tpu_custom_call.1} parent=1 // pred_check
      _
    $region7: #{tpu_custom_call.1} parent=1 // pred_check_branch
      %31 = sbr.rel (0) target = $region9
    $region8: #{tpu_custom_call.1} parent=1 // pred_region
      _
    $region9: #{tpu_custom_call.1} parent=1 // pred_fallthru
      _
    // Predicated region
    $region10: #{tpu_custom_call.1} parent=1 // pred_check
      _
    $region11: #{tpu_custom_call.1} parent=1 // pred_check_branch
      %33 = sbr.rel (0) target = $region13
    $region12: #{tpu_custom_call.1} parent=1 // pred_region
      _
    $region13: #{tpu_custom_call.1} parent=1 // pred_fallthru
      _
    // Predicated region
    $region14: #{tpu_custom_call.1} parent=1 // pred_check
      _
    $region15: #{tpu_custom_call.1} parent=1 // pred_check_branch
      %35 = sbr.rel (0) target = $region17
    $region16: #{tpu_custom_call.1} parent=1 // pred_region
      _
    $region17: #{tpu_custom_call.1} parent=1 // pred_fallthru
      _
    // Predicated region
    $region18: #{tpu_custom_call.1} parent=1 // pred_check
      _
    $region19: #{tpu_custom_call.1} parent=1 // pred_check_branch
      %37 = sbr.rel (0) target = $region21
    $region20: #{tpu_custom_call.1} parent=1 // pred_region
      _
    $region21: #{tpu_custom_call.1} parent=1 // pred_fallthru
      _
    // Predicated region
    $region22: #{tpu_custom_call.1} parent=1 // pred_check
      _
    $region23: #{tpu_custom_call.1} parent=1 // pred_check_branch
      %39 = sbr.rel (0) target = $region25
    $region24: #{tpu_custom_call.1} parent=1 // pred_region
      _
    $region25: #{tpu_custom_call.1} parent=1 // pred_fallthru
      _
    // Predicated region
    $region26: #{tpu_custom_call.1} parent=1 // pred_check
      _
    $region27: #{tpu_custom_call.1} parent=1 // pred_check_branch
      %41 = sbr.rel (0) target = $region29
    $region28: #{tpu_custom_call.1} parent=1 // pred_region
      _
    $region29: #{tpu_custom_call.1} parent=1 // pred_fallthru
      _
    // Predicated region
    $region30: #{tpu_custom_call.1} parent=1 // pred_check
      _
    $region31: #{tpu_custom_call.1} parent=1 // pred_check_branch
      %43 = sbr.rel (0) target = $region33
    $region32: #{tpu_custom_call.1} parent=1 // pred_region
      _
    $region33: #{tpu_custom_call.1} parent=1 // pred_fallthru
      _
    // Predicated region
    $region34: #{tpu_custom_call.1} parent=1 // pred_check
      _
    $region35: #{tpu_custom_call.1} parent=1 // pred_check_branch
      %45 = sbr.rel (0) target = $region37
    $region36: #{tpu_custom_call.1} parent=1 // pred_region
      _
    $region37: #{tpu_custom_call.1} parent=1 // pred_fallthru
      _
    // Predicated region
    $region38: #{tpu_custom_call.1} parent=1 // pred_check
      _
    $region39: #{tpu_custom_call.1} parent=1 // pred_check_branch
      %47 = sbr.rel (0) target = $region41
    $region40: #{tpu_custom_call.1} parent=1 // pred_region
      _
    $region41: #{tpu_custom_call.1} parent=1 // pred_fallthru
      _
    // Predicated region
    $region42: #{tpu_custom_call.1} parent=1 // pred_check
      _
    $region43: #{tpu_custom_call.1} parent=1 // pred_check_branch
      %49 = sbr.rel (0) target = $region45
    $region44: #{tpu_custom_call.1} parent=1 // pred_region
      _
    $region45: #{tpu_custom_call.1} parent=1 // pred_fallthru
      _
    // Predicated region
    $region46: #{tpu_custom_call.1} parent=1 // pred_check
      _
    $region47: #{tpu_custom_call.1} parent=1 // pred_check_branch
      %51 = sbr.rel (0) target = $region49
    $region48: #{tpu_custom_call.1} parent=1 // pred_region
      %52 = dma.done [#allocation3], 4608
    $region49: #{tpu_custom_call.1} parent=1 // pred_fallthru
      _
    %v53 = vld [vmem:[#allocation2] sm:$0xff]
    %v54 = vld [vmem:[#allocation2 + $0x8] sm:$0xff]
    %v55 = vld [vmem:[#allocation2 + $0x10] sm:$0xff]
    %v56 = vld [vmem:[#allocation2 + $0x18] sm:$0xff]
    %v57 = vld [vmem:[#allocation2 + $0x20] sm:$0xff]
    %v58 = vld [vmem:[#allocation2 + $0x28] sm:$0xff]
    %v59 = vld [vmem:[#allocation2 + $0x30] sm:$0xff]
    %v60 = vld [vmem:[#allocation2 + $0x38] sm:$0xff]
    %v61 = vld [vmem:[#allocation2 + $0x40] sm:$0xff]
    %v62 = vld [vmem:[#allocation2 + $0x48] sm:$0xff]
    %v63 = vld [vmem:[#allocation2 + $0x50] sm:$0xff]
    %v64 = vld [vmem:[#allocation2 + $0x58] sm:$0xff]
    %v65 = vld [vmem:[#allocation2 + $0x60] sm:$0xff]
    %v66 = vld [vmem:[#allocation2 + $0x68] sm:$0xff]
    %v67 = vld [vmem:[#allocation2 + $0x70] sm:$0xff]
    %v68 = vld [vmem:[#allocation2 + $0x78] sm:$0xff]
    %v69 = vld [vmem:[#allocation2 + $0x80] sm:$0xff]
    %v70 = vld [vmem:[#allocation2 + $0x88] sm:$0xff]
    %v71 = vld [vmem:[#allocation2 + $0x90] sm:$0x33]
    %v72 = vld [vmem:[#allocation2 + $0x98] sm:$0x33]
    %v73 = vld [vmem:[#allocation2 + $0xa0] sm:$0x33]
    %v74 = vld [vmem:[#allocation2 + $0xa8] sm:$0x33]
    %v75 = vld [vmem:[#allocation2 + $0xb0] sm:$0x33]
    %v76 = vld [vmem:[#allocation2 + $0xb8] sm:$0x33]
    %v77 = vld [vmem:[#allocation2 + $0xc0] sm:$0x33]
    %v78 = vld [vmem:[#allocation2 + $0xc8] sm:$0x33]
    %v79 = vld [vmem:[#allocation2 + $0xd0] sm:$0x33]
    %v80 = vld [vmem:[#allocation2 + $0xd8] sm:$0x33]
    %v81 = vld [vmem:[#allocation2 + $0xe0] sm:$0x33]
    %v82 = vld [vmem:[#allocation2 + $0xe8] sm:$0x33]
    %v83 = vld [vmem:[#allocation2 + $0xf0] sm:$0x33]
    %v84 = vld [vmem:[#allocation2 + $0xf8] sm:$0x33]
    %v85 = vld [vmem:[#allocation2 + $0x100] sm:$0x33]
    %v86 = vld [vmem:[#allocation2 + $0x108] sm:$0x33]
    %v87 = vld [vmem:[#allocation2 + $0x110] sm:$0x33]
    %v88 = vld [vmem:[#allocation2 + $0x118] sm:$0x33]
    %v89 = vunpack.c.l.bf16 %v53
    %v90 = vunpack.c.h.bf16 %v53
    %v91 = vunpack.c.l.bf16 %v54
    %v92 = vunpack.c.h.bf16 %v54
    %v93 = vunpack.c.l.bf16 %v55
    %v94 = vunpack.c.h.bf16 %v55
    %v95 = vunpack.c.l.bf16 %v56
    %v96 = vunpack.c.h.bf16 %v56
    %v97 = vunpack.c.l.bf16 %v57
    %v98 = vunpack.c.h.bf16 %v57
    %v99 = vunpack.c.l.bf16 %v58
    %v100 = vunpack.c.h.bf16 %v58
    %v101 = vunpack.c.l.bf16 %v59
    %v102 = vunpack.c.h.bf16 %v59
    %v103 = vunpack.c.l.bf16 %v60
    %v104 = vunpack.c.h.bf16 %v60
    %v105 = vunpack.c.l.bf16 %v61
    %v106 = vunpack.c.h.bf16 %v61
    %v107 = vunpack.c.l.bf16 %v62
    %v108 = vunpack.c.h.bf16 %v62
    %v109 = vunpack.c.l.bf16 %v63
    %v110 = vunpack.c.h.bf16 %v63
    %v111 = vunpack.c.l.bf16 %v64
    %v112 = vunpack.c.h.bf16 %v64
    %v113 = vunpack.c.l.bf16 %v65
    %v114 = vunpack.c.h.bf16 %v65
    %v115 = vunpack.c.l.bf16 %v66
    %v116 = vunpack.c.h.bf16 %v66
    %v117 = vunpack.c.l.bf16 %v67
    %v118 = vunpack.c.h.bf16 %v67
    %v119 = vunpack.c.l.bf16 %v68
    %v120 = vunpack.c.h.bf16 %v68
    %v121 = vunpack.c.l.bf16 %v69
    %v122 = vunpack.c.h.bf16 %v69
    %v123 = vunpack.c.l.bf16 %v70
    %v124 = vunpack.c.h.bf16 %v70
    %v125 = vunpack.c.l.bf16 %v71
    %v126 = vunpack.c.h.bf16 %v71
    %v127 = vunpack.c.l.bf16 %v72
    %v128 = vunpack.c.h.bf16 %v72
    %v129 = vunpack.c.l.bf16 %v73
    %v130 = vunpack.c.h.bf16 %v73
    %v131 = vunpack.c.l.bf16 %v74
    %v132 = vunpack.c.h.bf16 %v74
    %v133 = vunpack.c.l.bf16 %v75
    %v134 = vunpack.c.h.bf16 %v75
    %v135 = vunpack.c.l.bf16 %v76
    %v136 = vunpack.c.h.bf16 %v76
    %v137 = vunpack.c.l.bf16 %v77
    %v138 = vunpack.c.h.bf16 %v77
    %v139 = vunpack.c.l.bf16 %v78
    %v140 = vunpack.c.h.bf16 %v78
    %v141 = vunpack.c.l.bf16 %v79
    %v142 = vunpack.c.h.bf16 %v79
    %v143 = vunpack.c.l.bf16 %v80
    %v144 = vunpack.c.h.bf16 %v80
    %v145 = vunpack.c.l.bf16 %v81
    %v146 = vunpack.c.h.bf16 %v81
    %v147 = vunpack.c.l.bf16 %v82
    %v148 = vunpack.c.h.bf16 %v82
    %v149 = vunpack.c.l.bf16 %v83
    %v150 = vunpack.c.h.bf16 %v83
    %v151 = vunpack.c.l.bf16 %v84
    %v152 = vunpack.c.h.bf16 %v84
    %v153 = vunpack.c.l.bf16 %v85
    %v154 = vunpack.c.h.bf16 %v85
    %v155 = vunpack.c.l.bf16 %v86
    %v156 = vunpack.c.h.bf16 %v86
    %v157 = vunpack.c.l.bf16 %v87
    %v158 = vunpack.c.h.bf16 %v87
    %v159 = vunpack.c.l.bf16 %v88
    %v160 = vunpack.c.h.bf16 %v88
    %v161 = vld [vmem:[%s1] sm:$0xff]
    %v162 = vld [vmem:[%s1 + $0x8] sm:$0xff]
    %v163 = vld [vmem:[%s2] sm:$0xff]
    %v164 = vld [vmem:[%s2 + $0x8] sm:$0xff]
    %166 = vset.pattern.permute.xlu0 0
    %167 = vperm.xlu0 %166, %v163
    %v168 = vpop.permute.xlu0 %167
    %171 = vset.pattern.permute.xlu0 0
    %172 = vperm.xlu0 %171, %v164
    %v173 = vpop.permute.xlu0 %172
    %vm175 = vcmask 97280
    %v177 = vsel %vm175, %v161, 0
    %v180 = vsel %vm175, %v162, 0
    %vm182 = vcmask 1043456
    %v184 = vsel %vm182, %v125, 0
    %v187 = vsel %vm182, %v126, 0
    %v190 = vsel %vm182, %v127, 0
    %v193 = vsel %vm182, %v128, 0
    %v196 = vsel %vm182, %v129, 0
    %v199 = vsel %vm182, %v130, 0
    %v202 = vsel %vm182, %v131, 0
    %v205 = vsel %vm182, %v132, 0
    %v208 = vsel %vm182, %v133, 0
    %v211 = vsel %vm182, %v134, 0
    %v214 = vsel %vm182, %v135, 0
    %v217 = vsel %vm182, %v136, 0
    %v220 = vsel %vm182, %v137, 0
    %v223 = vsel %vm182, %v138, 0
    %v226 = vsel %vm182, %v139, 0
    %v229 = vsel %vm182, %v140, 0
    %v232 = vsel %vm182, %v141, 0
    %v235 = vsel %vm182, %v142, 0
    %v238 = vsel %vm182, %v143, 0
    %v241 = vsel %vm182, %v144, 0
    %v244 = vsel %vm182, %v145, 0
    %v247 = vsel %vm182, %v146, 0
    %v250 = vsel %vm182, %v147, 0
    %v253 = vsel %vm182, %v148, 0
    %v256 = vsel %vm182, %v149, 0
    %v259 = vsel %vm182, %v150, 0
    %v262 = vsel %vm182, %v151, 0
    %v265 = vsel %vm182, %v152, 0
    %v268 = vsel %vm182, %v153, 0
    %v271 = vsel %vm182, %v154, 0
    %v274 = vsel %vm182, %v155, 0
    %v277 = vsel %vm182, %v156, 0
    %v280 = vsel %vm182, %v157, 0
    %v283 = vsel %vm182, %v158, 0
    %v286 = vsel %vm182, %v159, 0
    %v289 = vsel %vm182, %v160, 0
    %291 = vmatprep.subr.mxu0 %v90
    %292 = vmatpush1.msra.mxu0 %v89
    %293 = vmatprep.subr.mxu0 %v187
    %294 = vmatpush1.msra.mxu0 %v184
    %295 = vmatprep.subr.mxu0 0.0
    %296 = vmatpush1.msra.mxu0 0.0
    %297 = vmatprep.subr.mxu0 0.0
    %298 = vmatpush1.msra.mxu0 0.0
    %299 = vmatprep.subr.mxu0 0.0
    %300 = vmatpush1.msra.mxu0 0.0
    %301 = vmatprep.subr.mxu0 0.0
    %302 = vmatpush1.msra.mxu0 0.0
    %303 = vmatprep.subr.mxu0 0.0
    %304 = vmatpush1.msra.mxu0 0.0
    %305 = vmatprep.subr.mxu0 0.0
    %306 = vmatpush1.msra.mxu0 0.0
    %307 = vmatprep.subr.mxu0 0.0
    %308 = vmatpush1.msra.mxu0 0.0
    %309 = vmatprep.subr.mxu0 0.0
    %310 = vmatpush1.msra.mxu0 0.0
    %311 = vmatprep.subr.mxu0 0.0
    %312 = vmatpush1.msra.mxu0 0.0
    %313 = vmatprep.subr.mxu0 0.0
    %314 = vmatpush1.msra.mxu0 0.0
    %315 = vmatprep.subr.mxu0 0.0
    %316 = vmatpush1.msra.mxu0 0.0
    %317 = vmatprep.subr.mxu0 0.0
    %318 = vmatpush1.msra.mxu0 0.0
    %319 = vmatprep.subr.mxu0 0.0
    %320 = vmatpush1.msra.mxu0 0.0
    %321 = vmatprep.subr.mxu0 0.0
    %322 = vmatpush1.msra.mxu0 0.0
    %323 = vmatprep.subr.mxu0 0.0
    %324 = vmatpush1.msra.mxu0 0.0
    %325 = vmatprep.subr.mxu0 0.0
    %326 = vmatpush1.msra.mxu0 0.0
    %327 = vmatprep.subr.mxu0 0.0
    %328 = vmatpush1.msra.mxu0 0.0
    %329 = vmatprep.subr.mxu0 0.0
    %330 = vmatpush1.msra.mxu0 0.0
    %331 = vmatprep.subr.mxu0 0.0
    %332 = vmatpush1.msra.mxu0 0.0
    %333 = vmatprep.subr.mxu0 0.0
    %334 = vmatpush1.msra.mxu0 0.0
    %335 = vmatprep.subr.mxu0 0.0
    %336 = vmatpush1.msra.mxu0 0.0
    %337 = vmatprep.subr.mxu0 0.0
    %338 = vmatpush1.msra.mxu0 0.0
    %339 = vmatprep.subr.mxu0 0.0
    %340 = vmatpush1.msra.mxu0 0.0
    %341 = vmatprep.subr.mxu0 0.0
    %342 = vmatpush1.msra.mxu0 0.0
    %343 = vmatprep.subr.mxu0 0.0
    %344 = vmatpush1.msra.mxu0 0.0
    %345 = vmatprep.subr.mxu0 0.0
    %346 = vmatpush1.msra.mxu0 0.0
    %347 = vmatprep.subr.mxu0 0.0
    %348 = vmatpush1.msra.mxu0 0.0
    %349 = vmatprep.subr.mxu0 0.0
    %350 = vmatpush1.msra.mxu0 0.0
    %351 = vmatprep.subr.mxu0 0.0
    %352 = vmatpush1.msra.mxu0 0.0
    %353 = vmatprep.subr.mxu0 0.0
    %354 = vmatpush1.msra.mxu0 0.0
    %355 = vmatprep.mubr.f32.mxu0 0.0
    %356 = vmatmul.mubr.f32.gmra.mrb[0].mxu0 %v177
    %v357 = vpop.f32.mrb[0].mxu0
    %v358 = vadd.f32 %v168, %v357
    %v359 = vpop.f32.mrb[0].mxu0
    %v360 = vadd.f32 %v168, %v359
    %361 = vmatprep.mubr.f32.mxu0 0.0
    %362 = vmatmul.mubr.f32.gmra.mrb[0].mxu0 %v180
    %v363 = vpop.f32.mrb[0].mxu0
    %v364 = vadd.f32 %v173, %v363
    %v365 = vpop.f32.mrb[0].mxu0
    %v366 = vadd.f32 %v173, %v365
    %367 = vdwg.mxu0
    %368 = vmatprep.subr.mxu0 %v92
    %369 = vmatpush1.msra.mxu0 %v91
    %370 = vmatprep.subr.mxu0 %v193
    %371 = vmatpush1.msra.mxu0 %v190
    %372 = vmatprep.subr.mxu0 0.0
    %373 = vmatpush1.msra.mxu0 0.0
    %374 = vmatprep.subr.mxu0 0.0
    %375 = vmatpush1.msra.mxu0 0.0
    %376 = vmatprep.subr.mxu0 0.0
    %377 = vmatpush1.msra.mxu0 0.0
    %378 = vmatprep.subr.mxu0 0.0
    %379 = vmatpush1.msra.mxu0 0.0
    %380 = vmatprep.subr.mxu0 0.0
    %381 = vmatpush1.msra.mxu0 0.0
    %382 = vmatprep.subr.mxu0 0.0
    %383 = vmatpush1.msra.mxu0 0.0
    %384 = vmatprep.subr.mxu0 0.0
    %385 = vmatpush1.msra.mxu0 0.0
    %386 = vmatprep.subr.mxu0 0.0
    %387 = vmatpush1.msra.mxu0 0.0
    %388 = vmatprep.subr.mxu0 0.0
    %389 = vmatpush1.msra.mxu0 0.0
    %390 = vmatprep.subr.mxu0 0.0
    %391 = vmatpush1.msra.mxu0 0.0
    %392 = vmatprep.subr.mxu0 0.0
    %393 = vmatpush1.msra.mxu0 0.0
    %394 = vmatprep.subr.mxu0 0.0
    %395 = vmatpush1.msra.mxu0 0.0
    %396 = vmatprep.subr.mxu0 0.0
    %397 = vmatpush1.msra.mxu0 0.0
    %398 = vmatprep.subr.mxu0 0.0
    %399 = vmatpush1.msra.mxu0 0.0
    %400 = vmatprep.subr.mxu0 0.0
    %401 = vmatpush1.msra.mxu0 0.0
    %402 = vmatprep.subr.mxu0 0.0
    %403 = vmatpush1.msra.mxu0 0.0
    %404 = vmatprep.subr.mxu0 0.0
    %405 = vmatpush1.msra.mxu0 0.0
    %406 = vmatprep.subr.mxu0 0.0
    %407 = vmatpush1.msra.mxu0 0.0
    %408 = vmatprep.subr.mxu0 0.0
    %409 = vmatpush1.msra.mxu0 0.0
    %410 = vmatprep.subr.mxu0 0.0
    %411 = vmatpush1.msra.mxu0 0.0
    %412 = vmatprep.subr.mxu0 0.0
    %413 = vmatpush1.msra.mxu0 0.0
    %414 = vmatprep.subr.mxu0 0.0
    %415 = vmatpush1.msra.mxu0 0.0
    %416 = vmatprep.subr.mxu0 0.0
    %417 = vmatpush1.msra.mxu0 0.0
    %418 = vmatprep.subr.mxu0 0.0
    %419 = vmatpush1.msra.mxu0 0.0
    %420 = vmatprep.subr.mxu0 0.0
    %421 = vmatpush1.msra.mxu0 0.0
    %422 = vmatprep.subr.mxu0 0.0
    %423 = vmatpush1.msra.mxu0 0.0
    %424 = vmatprep.subr.mxu0 0.0
    %425 = vmatpush1.msra.mxu0 0.0
    %426 = vmatprep.subr.mxu0 0.0
    %427 = vmatpush1.msra.mxu0 0.0
    %428 = vmatprep.subr.mxu0 0.0
    %429 = vmatpush1.msra.mxu0 0.0
    %430 = vmatprep.subr.mxu0 0.0
    %431 = vmatpush1.msra.mxu0 0.0
    %432 = vmatprep.mubr.f32.mxu0 0.0
    %433 = vmatmul.mubr.f32.gmra.mrb[0].mxu0 %v177
    %v434 = vpop.f32.mrb[0].mxu0
    %v435 = vadd.f32 %v168, %v434
    %v436 = vpop.f32.mrb[0].mxu0
    %v437 = vadd.f32 %v168, %v436
    %438 = vmatprep.mubr.f32.mxu0 0.0
    %439 = vmatmul.mubr.f32.gmra.mrb[0].mxu0 %v180
    %v440 = vpop.f32.mrb[0].mxu0
    %v441 = vadd.f32 %v173, %v440
    %v442 = vpop.f32.mrb[0].mxu0
    %v443 = vadd.f32 %v173, %v442
    %444 = vdwg.mxu0
    %445 = vmatprep.subr.mxu0 %v94
    %446 = vmatpush1.msra.mxu0 %v93
    %447 = vmatprep.subr.mxu0 %v199
    %448 = vmatpush1.msra.mxu0 %v196
    %449 = vmatprep.subr.mxu0 0.0
    %450 = vmatpush1.msra.mxu0 0.0
    %451 = vmatprep.subr.mxu0 0.0
    %452 = vmatpush1.msra.mxu0 0.0
    %453 = vmatprep.subr.mxu0 0.0
    %454 = vmatpush1.msra.mxu0 0.0
    %455 = vmatprep.subr.mxu0 0.0
    %456 = vmatpush1.msra.mxu0 0.0
    %457 = vmatprep.subr.mxu0 0.0
    %458 = vmatpush1.msra.mxu0 0.0
    %459 = vmatprep.subr.mxu0 0.0
    %460 = vmatpush1.msra.mxu0 0.0
    %461 = vmatprep.subr.mxu0 0.0
    %462 = vmatpush1.msra.mxu0 0.0
    %463 = vmatprep.subr.mxu0 0.0
    %464 = vmatpush1.msra.mxu0 0.0
    %465 = vmatprep.subr.mxu0 0.0
    %466 = vmatpush1.msra.mxu0 0.0
    %467 = vmatprep.subr.mxu0 0.0
    %468 = vmatpush1.msra.mxu0 0.0
    %469 = vmatprep.subr.mxu0 0.0
    %470 = vmatpush1.msra.mxu0 0.0
    %471 = vmatprep.subr.mxu0 0.0
    %472 = vmatpush1.msra.mxu0 0.0
    %473 = vmatprep.subr.mxu0 0.0
    %474 = vmatpush1.msra.mxu0 0.0
    %475 = vmatprep.subr.mxu0 0.0
    %476 = vmatpush1.msra.mxu0 0.0
    %477 = vmatprep.subr.mxu0 0.0
    %478 = vmatpush1.msra.mxu0 0.0
    %479 = vmatprep.subr.mxu0 0.0
    %480 = vmatpush1.msra.mxu0 0.0
    %481 = vmatprep.subr.mxu0 0.0
    %482 = vmatpush1.msra.mxu0 0.0
    %483 = vmatprep.subr.mxu0 0.0
    %484 = vmatpush1.msra.mxu0 0.0
    %485 = vmatprep.subr.mxu0 0.0
    %486 = vmatpush1.msra.mxu0 0.0
    %487 = vmatprep.subr.mxu0 0.0
    %488 = vmatpush1.msra.mxu0 0.0
    %489 = vmatprep.subr.mxu0 0.0
    %490 = vmatpush1.msra.mxu0 0.0
    %491 = vmatprep.subr.mxu0 0.0
    %492 = vmatpush1.msra.mxu0 0.0
    %493 = vmatprep.subr.mxu0 0.0
    %494 = vmatpush1.msra.mxu0 0.0
    %495 = vmatprep.subr.mxu0 0.0
    %496 = vmatpush1.msra.mxu0 0.0
    %497 = vmatprep.subr.mxu0 0.0
    %498 = vmatpush1.msra.mxu0 0.0
    %499 = vmatprep.subr.mxu0 0.0
    %500 = vmatpush1.msra.mxu0 0.0
    %501 = vmatprep.subr.mxu0 0.0
    %502 = vmatpush1.msra.mxu0 0.0
    %503 = vmatprep.subr.mxu0 0.0
    %504 = vmatpush1.msra.mxu0 0.0
    %505 = vmatprep.subr.mxu0 0.0
    %506 = vmatpush1.msra.mxu0 0.0
    %507 = vmatprep.subr.mxu0 0.0
    %508 = vmatpush1.msra.mxu0 0.0
    %509 = vmatprep.mubr.f32.mxu0 0.0
    %510 = vmatmul.mubr.f32.gmra.mrb[0].mxu0 %v177
    %v511 = vpop.f32.mrb[0].mxu0
    %v512 = vadd.f32 %v168, %v511
    %v513 = vpop.f32.mrb[0].mxu0
    %v514 = vadd.f32 %v168, %v513
    %515 = vmatprep.mubr.f32.mxu0 0.0
    %516 = vmatmul.mubr.f32.gmra.mrb[0].mxu0 %v180
    %v517 = vpop.f32.mrb[0].mxu0
    %v518 = vadd.f32 %v173, %v517
    %v519 = vpop.f32.mrb[0].mxu0
    %v520 = vadd.f32 %v173, %v519
    %521 = vdwg.mxu0
    %522 = vmatprep.subr.mxu0 %v96
    %523 = vmatpush1.msra.mxu0 %v95
    %524 = vmatprep.subr.mxu0 %v205
    %525 = vmatpush1.msra.mxu0 %v202
    %526 = vmatprep.subr.mxu0 0.0
    %527 = vmatpush1.msra.mxu0 0.0
    %528 = vmatprep.subr.mxu0 0.0
    %529 = vmatpush1.msra.mxu0 0.0
    %530 = vmatprep.subr.mxu0 0.0
    %531 = vmatpush1.msra.mxu0 0.0
    %532 = vmatprep.subr.mxu0 0.0
    %533 = vmatpush1.msra.mxu0 0.0
    %534 = vmatprep.subr.mxu0 0.0
    %535 = vmatpush1.msra.mxu0 0.0
    %536 = vmatprep.subr.mxu0 0.0
    %537 = vmatpush1.msra.mxu0 0.0
    %538 = vmatprep.subr.mxu0 0.0
    %539 = vmatpush1.msra.mxu0 0.0
    %540 = vmatprep.subr.mxu0 0.0
    %541 = vmatpush1.msra.mxu0 0.0
    %542 = vmatprep.subr.mxu0 0.0
    %543 = vmatpush1.msra.mxu0 0.0
    %544 = vmatprep.subr.mxu0 0.0
    %545 = vmatpush1.msra.mxu0 0.0
    %546 = vmatprep.subr.mxu0 0.0
    %547 = vmatpush1.msra.mxu0 0.0
    %548 = vmatprep.subr.mxu0 0.0
    %549 = vmatpush1.msra.mxu0 0.0
    %550 = vmatprep.subr.mxu0 0.0
    %551 = vmatpush1.msra.mxu0 0.0
    %552 = vmatprep.subr.mxu0 0.0
    %553 = vmatpush1.msra.mxu0 0.0
    %554 = vmatprep.subr.mxu0 0.0
    %555 = vmatpush1.msra.mxu0 0.0
    %556 = vmatprep.subr.mxu0 0.0
    %557 = vmatpush1.msra.mxu0 0.0
    %558 = vmatprep.subr.mxu0 0.0
    %559 = vmatpush1.msra.mxu0 0.0
    %560 = vmatprep.subr.mxu0 0.0
    %561 = vmatpush1.msra.mxu0 0.0
    %562 = vmatprep.subr.mxu0 0.0
    %563 = vmatpush1.msra.mxu0 0.0
    %564 = vmatprep.subr.mxu0 0.0
    %565 = vmatpush1.msra.mxu0 0.0
    %566 = vmatprep.subr.mxu0 0.0
    %567 = vmatpush1.msra.mxu0 0.0
    %568 = vmatprep.subr.mxu0 0.0
    %569 = vmatpush1.msra.mxu0 0.0
    %570 = vmatprep.subr.mxu0 0.0
    %571 = vmatpush1.msra.mxu0 0.0
    %572 = vmatprep.subr.mxu0 0.0
    %573 = vmatpush1.msra.mxu0 0.0
    %574 = vmatprep.subr.mxu0 0.0
    %575 = vmatpush1.msra.mxu0 0.0
    %576 = vmatprep.subr.mxu0 0.0
    %577 = vmatpush1.msra.mxu0 0.0
    %578 = vmatprep.subr.mxu0 0.0
    %579 = vmatpush1.msra.mxu0 0.0
    %580 = vmatprep.subr.mxu0 0.0
    %581 = vmatpush1.msra.mxu0 0.0
    %582 = vmatprep.subr.mxu0 0.0
    %583 = vmatpush1.msra.mxu0 0.0
    %584 = vmatprep.subr.mxu0 0.0
    %585 = vmatpush1.msra.mxu0 0.0
    %586 = vmatprep.mubr.f32.mxu0 0.0
    %587 = vmatmul.mubr.f32.gmra.mrb[0].mxu0 %v177
    %v588 = vpop.f32.mrb[0].mxu0
    %v589 = vadd.f32 %v168, %v588
    %v590 = vpop.f32.mrb[0].mxu0
    %v591 = vadd.f32 %v168, %v590
    %592 = vmatprep.mubr.f32.mxu0 0.0
    %593 = vmatmul.mubr.f32.gmra.mrb[0].mxu0 %v180
    %v594 = vpop.f32.mrb[0].mxu0
    %v595 = vadd.f32 %v173, %v594
    %v596 = vpop.f32.mrb[0].mxu0
    %v597 = vadd.f32 %v173, %v596
    %598 = vdwg.mxu0
    %599 = vmatprep.subr.mxu0 %v98
    %600 = vmatpush1.msra.mxu0 %v97
    %601 = vmatprep.subr.mxu0 %v211
    %602 = vmatpush1.msra.mxu0 %v208
    %603 = vmatprep.subr.mxu0 0.0
    %604 = vmatpush1.msra.mxu0 0.0
    %605 = vmatprep.subr.mxu0 0.0
    %606 = vmatpush1.msra.mxu0 0.0
    %607 = vmatprep.subr.mxu0 0.0
    %608 = vmatpush1.msra.mxu0 0.0
    %609 = vmatprep.subr.mxu0 0.0
    %610 = vmatpush1.msra.mxu0 0.0
    %611 = vmatprep.subr.mxu0 0.0
    %612 = vmatpush1.msra.mxu0 0.0
    %613 = vmatprep.subr.mxu0 0.0
    %614 = vmatpush1.msra.mxu0 0.0
    %615 = vmatprep.subr.mxu0 0.0
    %616 = vmatpush1.msra.mxu0 0.0
    %617 = vmatprep.subr.mxu0 0.0
    %618 = vmatpush1.msra.mxu0 0.0
    %619 = vmatprep.subr.mxu0 0.0
    %620 = vmatpush1.msra.mxu0 0.0
    %621 = vmatprep.subr.mxu0 0.0
    %622 = vmatpush1.msra.mxu0 0.0
    %623 = vmatprep.subr.mxu0 0.0
    %624 = vmatpush1.msra.mxu0 0.0
    %625 = vmatprep.subr.mxu0 0.0
    %626 = vmatpush1.msra.mxu0 0.0
    %627 = vmatprep.subr.mxu0 0.0
    %628 = vmatpush1.msra.mxu0 0.0
    %629 = vmatprep.subr.mxu0 0.0
    %630 = vmatpush1.msra.mxu0 0.0
    %631 = vmatprep.subr.mxu0 0.0
    %632 = vmatpush1.msra.mxu0 0.0
    %633 = vmatprep.subr.mxu0 0.0
    %634 = vmatpush1.msra.mxu0 0.0
    %635 = vmatprep.subr.mxu0 0.0
    %636 = vmatpush1.msra.mxu0 0.0
    %637 = vmatprep.subr.mxu0 0.0
    %638 = vmatpush1.msra.mxu0 0.0
    %639 = vmatprep.subr.mxu0 0.0
    %640 = vmatpush1.msra.mxu0 0.0
    %641 = vmatprep.subr.mxu0 0.0
    %642 = vmatpush1.msra.mxu0 0.0
    %643 = vmatprep.subr.mxu0 0.0
    %644 = vmatpush1.msra.mxu0 0.0
    %645 = vmatprep.subr.mxu0 0.0
    %646 = vmatpush1.msra.mxu0 0.0
    %647 = vmatprep.subr.mxu0 0.0
    %648 = vmatpush1.msra.mxu0 0.0
    %649 = vmatprep.subr.mxu0 0.0
    %650 = vmatpush1.msra.mxu0 0.0
    %651 = vmatprep.subr.mxu0 0.0
    %652 = vmatpush1.msra.mxu0 0.0
    %653 = vmatprep.subr.mxu0 0.0
    %654 = vmatpush1.msra.mxu0 0.0
    %655 = vmatprep.subr.mxu0 0.0
    %656 = vmatpush1.msra.mxu0 0.0
    %657 = vmatprep.subr.mxu0 0.0
    %658 = vmatpush1.msra.mxu0 0.0
    %659 = vmatprep.subr.mxu0 0.0
    %660 = vmatpush1.msra.mxu0 0.0
    %661 = vmatprep.subr.mxu0 0.0
    %662 = vmatpush1.msra.mxu0 0.0
    %663 = vmatprep.mubr.f32.mxu0 0.0
    %664 = vmatmul.mubr.f32.gmra.mrb[0].mxu0 %v177
    %v665 = vpop.f32.mrb[0].mxu0
    %v666 = vadd.f32 %v168, %v665
    %v667 = vpop.f32.mrb[0].mxu0
    %v668 = vadd.f32 %v168, %v667
    %669 = vmatprep.mubr.f32.mxu0 0.0
    %670 = vmatmul.mubr.f32.gmra.mrb[0].mxu0 %v180
    %v671 = vpop.f32.mrb[0].mxu0
    %v672 = vadd.f32 %v173, %v671
    %v673 = vpop.f32.mrb[0].mxu0
    %v674 = vadd.f32 %v173, %v673
    %675 = vdwg.mxu0
    %676 = vmatprep.subr.mxu0 %v100
    %677 = vmatpush1.msra.mxu0 %v99
    %678 = vmatprep.subr.mxu0 %v217
    %679 = vmatpush1.msra.mxu0 %v214
    %680 = vmatprep.subr.mxu0 0.0
    %681 = vmatpush1.msra.mxu0 0.0
    %682 = vmatprep.subr.mxu0 0.0
    %683 = vmatpush1.msra.mxu0 0.0
    %684 = vmatprep.subr.mxu0 0.0
    %685 = vmatpush1.msra.mxu0 0.0
    %686 = vmatprep.subr.mxu0 0.0
    %687 = vmatpush1.msra.mxu0 0.0
    %688 = vmatprep.subr.mxu0 0.0
    %689 = vmatpush1.msra.mxu0 0.0
    %690 = vmatprep.subr.mxu0 0.0
    %691 = vmatpush1.msra.mxu0 0.0
    %692 = vmatprep.subr.mxu0 0.0
    %693 = vmatpush1.msra.mxu0 0.0
    %694 = vmatprep.subr.mxu0 0.0
    %695 = vmatpush1.msra.mxu0 0.0
    %696 = vmatprep.subr.mxu0 0.0
    %697 = vmatpush1.msra.mxu0 0.0
    %698 = vmatprep.subr.mxu0 0.0
    %699 = vmatpush1.msra.mxu0 0.0
    %700 = vmatprep.subr.mxu0 0.0
    %701 = vmatpush1.msra.mxu0 0.0
    %702 = vmatprep.subr.mxu0 0.0
    %703 = vmatpush1.msra.mxu0 0.0
    %704 = vmatprep.subr.mxu0 0.0
    %705 = vmatpush1.msra.mxu0 0.0
    %706 = vmatprep.subr.mxu0 0.0
    %707 = vmatpush1.msra.mxu0 0.0
    %708 = vmatprep.subr.mxu0 0.0
    %709 = vmatpush1.msra.mxu0 0.0
    %710 = vmatprep.subr.mxu0 0.0
    %711 = vmatpush1.msra.mxu0 0.0
    %712 = vmatprep.subr.mxu0 0.0
    %713 = vmatpush1.msra.mxu0 0.0
    %714 = vmatprep.subr.mxu0 0.0
    %715 = vmatpush1.msra.mxu0 0.0
    %716 = vmatprep.subr.mxu0 0.0
    %717 = vmatpush1.msra.mxu0 0.0
    %718 = vmatprep.subr.mxu0 0.0
    %719 = vmatpush1.msra.mxu0 0.0
    %720 = vmatprep.subr.mxu0 0.0
    %721 = vmatpush1.msra.mxu0 0.0
    %722 = vmatprep.subr.mxu0 0.0
    %723 = vmatpush1.msra.mxu0 0.0
    %724 = vmatprep.subr.mxu0 0.0
    %725 = vmatpush1.msra.mxu0 0.0
    %726 = vmatprep.subr.mxu0 0.0
    %727 = vmatpush1.msra.mxu0 0.0
    %728 = vmatprep.subr.mxu0 0.0
    %729 = vmatpush1.msra.mxu0 0.0
    %730 = vmatprep.subr.mxu0 0.0
    %731 = vmatpush1.msra.mxu0 0.0
    %732 = vmatprep.subr.mxu0 0.0
    %733 = vmatpush1.msra.mxu0 0.0
    %734 = vmatprep.subr.mxu0 0.0
    %735 = vmatpush1.msra.mxu0 0.0
    %736 = vmatprep.subr.mxu0 0.0
    %737 = vmatpush1.msra.mxu0 0.0
    %738 = vmatprep.subr.mxu0 0.0
    %739 = vmatpush1.msra.mxu0 0.0
    %740 = vmatprep.mubr.f32.mxu0 0.0
    %741 = vmatmul.mubr.f32.gmra.mrb[0].mxu0 %v177
    %v742 = vpop.f32.mrb[0].mxu0
    %v743 = vadd.f32 %v168, %v742
    %v744 = vpop.f32.mrb[0].mxu0
    %v745 = vadd.f32 %v168, %v744
    %746 = vmatprep.mubr.f32.mxu0 0.0
    %747 = vmatmul.mubr.f32.gmra.mrb[0].mxu0 %v180
    %v748 = vpop.f32.mrb[0].mxu0
    %v749 = vadd.f32 %v173, %v748
    %v750 = vpop.f32.mrb[0].mxu0
    %v751 = vadd.f32 %v173, %v750
    %752 = vdwg.mxu0
    %753 = vmatprep.subr.mxu0 %v102
    %754 = vmatpush1.msra.mxu0 %v101
    %755 = vmatprep.subr.mxu0 %v223
    %756 = vmatpush1.msra.mxu0 %v220
    %757 = vmatprep.subr.mxu0 0.0
    %758 = vmatpush1.msra.mxu0 0.0
    %759 = vmatprep.subr.mxu0 0.0
    %760 = vmatpush1.msra.mxu0 0.0
    %761 = vmatprep.subr.mxu0 0.0
    %762 = vmatpush1.msra.mxu0 0.0
    %763 = vmatprep.subr.mxu0 0.0
    %764 = vmatpush1.msra.mxu0 0.0
    %765 = vmatprep.subr.mxu0 0.0
    %766 = vmatpush1.msra.mxu0 0.0
    %767 = vmatprep.subr.mxu0 0.0
    %768 = vmatpush1.msra.mxu0 0.0
    %769 = vmatprep.subr.mxu0 0.0
    %770 = vmatpush1.msra.mxu0 0.0
    %771 = vmatprep.subr.mxu0 0.0
    %772 = vmatpush1.msra.mxu0 0.0
    %773 = vmatprep.subr.mxu0 0.0
    %774 = vmatpush1.msra.mxu0 0.0
    %775 = vmatprep.subr.mxu0 0.0
    %776 = vmatpush1.msra.mxu0 0.0
    %777 = vmatprep.subr.mxu0 0.0
    %778 = vmatpush1.msra.mxu0 0.0
    %779 = vmatprep.subr.mxu0 0.0
    %780 = vmatpush1.msra.mxu0 0.0
    %781 = vmatprep.subr.mxu0 0.0
    %782 = vmatpush1.msra.mxu0 0.0
    %783 = vmatprep.subr.mxu0 0.0
    %784 = vmatpush1.msra.mxu0 0.0
    %785 = vmatprep.subr.mxu0 0.0
    %786 = vmatpush1.msra.mxu0 0.0
    %787 = vmatprep.subr.mxu0 0.0
    %788 = vmatpush1.msra.mxu0 0.0
    %789 = vmatprep.subr.mxu0 0.0
    %790 = vmatpush1.msra.mxu0 0.0
    %791 = vmatprep.subr.mxu0 0.0
    %792 = vmatpush1.msra.mxu0 0.0
    %793 = vmatprep.subr.mxu0 0.0
    %794 = vmatpush1.msra.mxu0 0.0
    %795 = vmatprep.subr.mxu0 0.0
    %796 = vmatpush1.msra.mxu0 0.0
    %797 = vmatprep.subr.mxu0 0.0
    %798 = vmatpush1.msra.mxu0 0.0
    %799 = vmatprep.subr.mxu0 0.0
    %800 = vmatpush1.msra.mxu0 0.0
    %801 = vmatprep.subr.mxu0 0.0
    %802 = vmatpush1.msra.mxu0 0.0
    %803 = vmatprep.subr.mxu0 0.0
    %804 = vmatpush1.msra.mxu0 0.0
    %805 = vmatprep.subr.mxu0 0.0
    %806 = vmatpush1.msra.mxu0 0.0
    %807 = vmatprep.subr.mxu0 0.0
    %808 = vmatpush1.msra.mxu0 0.0
    %809 = vmatprep.subr.mxu0 0.0
    %810 = vmatpush1.msra.mxu0 0.0
    %811 = vmatprep.subr.mxu0 0.0
    %812 = vmatpush1.msra.mxu0 0.0
    %813 = vmatprep.subr.mxu0 0.0
    %814 = vmatpush1.msra.mxu0 0.0
    %815 = vmatprep.subr.mxu0 0.0
    %816 = vmatpush1.msra.mxu0 0.0
    %817 = vmatprep.mubr.f32.mxu0 0.0
    %818 = vmatmul.mubr.f32.gmra.mrb[0].mxu0 %v177
    %v819 = vpop.f32.mrb[0].mxu0
    %v820 = vadd.f32 %v168, %v819
    %v821 = vpop.f32.mrb[0].mxu0
    %v822 = vadd.f32 %v168, %v821
    %823 = vmatprep.mubr.f32.mxu0 0.0
    %824 = vmatmul.mubr.f32.gmra.mrb[0].mxu0 %v180
    %v825 = vpop.f32.mrb[0].mxu0
    %v826 = vadd.f32 %v173, %v825
    %v827 = vpop.f32.mrb[0].mxu0
    %v828 = vadd.f32 %v173, %v827
    %829 = vdwg.mxu0
    %830 = vmatprep.subr.mxu0 %v104
    %831 = vmatpush1.msra.mxu0 %v103
    %832 = vmatprep.subr.mxu0 %v229
    %833 = vmatpush1.msra.mxu0 %v226
    %834 = vmatprep.subr.mxu0 0.0
    %835 = vmatpush1.msra.mxu0 0.0
    %836 = vmatprep.subr.mxu0 0.0
    %837 = vmatpush1.msra.mxu0 0.0
    %838 = vmatprep.subr.mxu0 0.0
    %839 = vmatpush1.msra.mxu0 0.0
    %840 = vmatprep.subr.mxu0 0.0
    %841 = vmatpush1.msra.mxu0 0.0
    %842 = vmatprep.subr.mxu0 0.0
    %843 = vmatpush1.msra.mxu0 0.0
    %844 = vmatprep.subr.mxu0 0.0
    %845 = vmatpush1.msra.mxu0 0.0
    %846 = vmatprep.subr.mxu0 0.0
    %847 = vmatpush1.msra.mxu0 0.0
    %848 = vmatprep.subr.mxu0 0.0
    %849 = vmatpush1.msra.mxu0 0.0
    %850 = vmatprep.subr.mxu0 0.0
    %851 = vmatpush1.msra.mxu0 0.0
    %852 = vmatprep.subr.mxu0 0.0
    %853 = vmatpush1.msra.mxu0 0.0
    %854 = vmatprep.subr.mxu0 0.0
    %855 = vmatpush1.msra.mxu0 0.0
    %856 = vmatprep.subr.mxu0 0.0
    %857 = vmatpush1.msra.mxu0 0.0
    %858 = vmatprep.subr.mxu0 0.0
    %859 = vmatpush1.msra.mxu0 0.0
    %860 = vmatprep.subr.mxu0 0.0
    %861 = vmatpush1.msra.mxu0 0.0
    %862 = vmatprep.subr.mxu0 0.0
    %863 = vmatpush1.msra.mxu0 0.0
    %864 = vmatprep.subr.mxu0 0.0
    %865 = vmatpush1.msra.mxu0 0.0
    %866 = vmatprep.subr.mxu0 0.0
    %867 = vmatpush1.msra.mxu0 0.0
    %868 = vmatprep.subr.mxu0 0.0
    %869 = vmatpush1.msra.mxu0 0.0
    %870 = vmatprep.subr.mxu0 0.0
    %871 = vmatpush1.msra.mxu0 0.0
    %872 = vmatprep.subr.mxu0 0.0
    %873 = vmatpush1.msra.mxu0 0.0
    %874 = vmatprep.subr.mxu0 0.0
    %875 = vmatpush1.msra.mxu0 0.0
    %876 = vmatprep.subr.mxu0 0.0
    %877 = vmatpush1.msra.mxu0 0.0
    %878 = vmatprep.subr.mxu0 0.0
    %879 = vmatpush1.msra.mxu0 0.0
    %880 = vmatprep.subr.mxu0 0.0
    %881 = vmatpush1.msra.mxu0 0.0
    %882 = vmatprep.subr.mxu0 0.0
    %883 = vmatpush1.msra.mxu0 0.0
    %884 = vmatprep.subr.mxu0 0.0
    %885 = vmatpush1.msra.mxu0 0.0
    %886 = vmatprep.subr.mxu0 0.0
    %887 = vmatpush1.msra.mxu0 0.0
    %888 = vmatprep.subr.mxu0 0.0
    %889 = vmatpush1.msra.mxu0 0.0
    %890 = vmatprep.subr.mxu0 0.0
    %891 = vmatpush1.msra.mxu0 0.0
    %892 = vmatprep.subr.mxu0 0.0
    %893 = vmatpush1.msra.mxu0 0.0
    %894 = vmatprep.mubr.f32.mxu0 0.0
    %895 = vmatmul.mubr.f32.gmra.mrb[0].mxu0 %v177
    %v896 = vpop.f32.mrb[0].mxu0
    %v897 = vadd.f32 %v168, %v896
    %v898 = vpop.f32.mrb[0].mxu0
    %v899 = vadd.f32 %v168, %v898
    %900 = vmatprep.mubr.f32.mxu0 0.0
    %901 = vmatmul.mubr.f32.gmra.mrb[0].mxu0 %v180
    %v902 = vpop.f32.mrb[0].mxu0
    %v903 = vadd.f32 %v173, %v902
    %v904 = vpop.f32.mrb[0].mxu0
    %v905 = vadd.f32 %v173, %v904
    %906 = vdwg.mxu0
    %907 = vmatprep.subr.mxu0 %v106
    %908 = vmatpush1.msra.mxu0 %v105
    %909 = vmatprep.subr.mxu0 %v235
    %910 = vmatpush1.msra.mxu0 %v232
    %911 = vmatprep.subr.mxu0 0.0
    %912 = vmatpush1.msra.mxu0 0.0
    %913 = vmatprep.subr.mxu0 0.0
    %914 = vmatpush1.msra.mxu0 0.0
    %915 = vmatprep.subr.mxu0 0.0
    %916 = vmatpush1.msra.mxu0 0.0
    %917 = vmatprep.subr.mxu0 0.0
    %918 = vmatpush1.msra.mxu0 0.0
    %919 = vmatprep.subr.mxu0 0.0
    %920 = vmatpush1.msra.mxu0 0.0
    %921 = vmatprep.subr.mxu0 0.0
    %922 = vmatpush1.msra.mxu0 0.0
    %923 = vmatprep.subr.mxu0 0.0
    %924 = vmatpush1.msra.mxu0 0.0
    %925 = vmatprep.subr.mxu0 0.0
    %926 = vmatpush1.msra.mxu0 0.0
    %927 = vmatprep.subr.mxu0 0.0
    %928 = vmatpush1.msra.mxu0 0.0
    %929 = vmatprep.subr.mxu0 0.0
    %930 = vmatpush1.msra.mxu0 0.0
    %931 = vmatprep.subr.mxu0 0.0
    %932 = vmatpush1.msra.mxu0 0.0
    %933 = vmatprep.subr.mxu0 0.0
    %934 = vmatpush1.msra.mxu0 0.0
    %935 = vmatprep.subr.mxu0 0.0
    %936 = vmatpush1.msra.mxu0 0.0
    %937 = vmatprep.subr.mxu0 0.0
    %938 = vmatpush1.msra.mxu0 0.0
    %939 = vmatprep.subr.mxu0 0.0
    %940 = vmatpush1.msra.mxu0 0.0
    %941 = vmatprep.subr.mxu0 0.0
    %942 = vmatpush1.msra.mxu0 0.0
    %943 = vmatprep.subr.mxu0 0.0
    %944 = vmatpush1.msra.mxu0 0.0
    %945 = vmatprep.subr.mxu0 0.0
    %946 = vmatpush1.msra.mxu0 0.0
    %947 = vmatprep.subr.mxu0 0.0
    %948 = vmatpush1.msra.mxu0 0.0
    %949 = vmatprep.subr.mxu0 0.0
    %950 = vmatpush1.msra.mxu0 0.0
    %951 = vmatprep.subr.mxu0 0.0
    %952 = vmatpush1.msra.mxu0 0.0
    %953 = vmatprep.subr.mxu0 0.0
    %954 = vmatpush1.msra.mxu0 0.0
    %955 = vmatprep.subr.mxu0 0.0
    %956 = vmatpush1.msra.mxu0 0.0
    %957 = vmatprep.subr.mxu0 0.0
    %958 = vmatpush1.msra.mxu0 0.0
    %959 = vmatprep.subr.mxu0 0.0
    %960 = vmatpush1.msra.mxu0 0.0
    %961 = vmatprep.subr.mxu0 0.0
    %962 = vmatpush1.msra.mxu0 0.0
    %963 = vmatprep.subr.mxu0 0.0
    %964 = vmatpush1.msra.mxu0 0.0
    %965 = vmatprep.subr.mxu0 0.0
    %966 = vmatpush1.msra.mxu0 0.0
    %967 = vmatprep.subr.mxu0 0.0
    %968 = vmatpush1.msra.mxu0 0.0
    %969 = vmatprep.subr.mxu0 0.0
    %970 = vmatpush1.msra.mxu0 0.0
    %971 = vmatprep.mubr.f32.mxu0 0.0
    %972 = vmatmul.mubr.f32.gmra.mrb[0].mxu0 %v177
    %v973 = vpop.f32.mrb[0].mxu0
    %v974 = vadd.f32 %v168, %v973
    %v975 = vpop.f32.mrb[0].mxu0
    %v976 = vadd.f32 %v168, %v975
    %977 = vmatprep.mubr.f32.mxu0 0.0
    %978 = vmatmul.mubr.f32.gmra.mrb[0].mxu0 %v180
    %v979 = vpop.f32.mrb[0].mxu0
    %v980 = vadd.f32 %v173, %v979
    %v981 = vpop.f32.mrb[0].mxu0
    %v982 = vadd.f32 %v173, %v981
    %983 = vdwg.mxu0
    %984 = vmatprep.subr.mxu0 %v108
    %985 = vmatpush1.msra.mxu0 %v107
    %986 = vmatprep.subr.mxu0 %v241
    %987 = vmatpush1.msra.mxu0 %v238
    %988 = vmatprep.subr.mxu0 0.0
    %989 = vmatpush1.msra.mxu0 0.0
    %990 = vmatprep.subr.mxu0 0.0
    %991 = vmatpush1.msra.mxu0 0.0
    %992 = vmatprep.subr.mxu0 0.0
    %993 = vmatpush1.msra.mxu0 0.0
    %994 = vmatprep.subr.mxu0 0.0
    %995 = vmatpush1.msra.mxu0 0.0
    %996 = vmatprep.subr.mxu0 0.0
    %997 = vmatpush1.msra.mxu0 0.0
    %998 = vmatprep.subr.mxu0 0.0
    %999 = vmatpush1.msra.mxu0 0.0
    %1000 = vmatprep.subr.mxu0 0.0
    %1001 = vmatpush1.msra.mxu0 0.0
    %1002 = vmatprep.subr.mxu0 0.0
    %1003 = vmatpush1.msra.mxu0 0.0
    %1004 = vmatprep.subr.mxu0 0.0
    %1005 = vmatpush1.msra.mxu0 0.0
    %1006 = vmatprep.subr.mxu0 0.0
    %1007 = vmatpush1.msra.mxu0 0.0
    %1008 = vmatprep.subr.mxu0 0.0
    %1009 = vmatpush1.msra.mxu0 0.0
    %1010 = vmatprep.subr.mxu0 0.0
    %1011 = vmatpush1.msra.mxu0 0.0
    %1012 = vmatprep.subr.mxu0 0.0
    %1013 = vmatpush1.msra.mxu0 0.0
    %1014 = vmatprep.subr.mxu0 0.0
    %1015 = vmatpush1.msra.mxu0 0.0
    %1016 = vmatprep.subr.mxu0 0.0
    %1017 = vmatpush1.msra.mxu0 0.0
    %1018 = vmatprep.subr.mxu0 0.0
    %1019 = vmatpush1.msra.mxu0 0.0
    %1020 = vmatprep.subr.mxu0 0.0
    %1021 = vmatpush1.msra.mxu0 0.0
    %1022 = vmatprep.subr.mxu0 0.0
    %1023 = vmatpush1.msra.mxu0 0.0
    %1024 = vmatprep.subr.mxu0 0.0
    %1025 = vmatpush1.msra.mxu0 0.0
    %1026 = vmatprep.subr.mxu0 0.0
    %1027 = vmatpush1.msra.mxu0 0.0
    %1028 = vmatprep.subr.mxu0 0.0
    %1029 = vmatpush1.msra.mxu0 0.0
    %1030 = vmatprep.subr.mxu0 0.0
    %1031 = vmatpush1.msra.mxu0 0.0
    %1032 = vmatprep.subr.mxu0 0.0
    %1033 = vmatpush1.msra.mxu0 0.0
    %1034 = vmatprep.subr.mxu0 0.0
    %1035 = vmatpush1.msra.mxu0 0.0
    %1036 = vmatprep.subr.mxu0 0.0
    %1037 = vmatpush1.msra.mxu0 0.0
    %1038 = vmatprep.subr.mxu0 0.0
    %1039 = vmatpush1.msra.mxu0 0.0
    %1040 = vmatprep.subr.mxu0 0.0
    %1041 = vmatpush1.msra.mxu0 0.0
    %1042 = vmatprep.subr.mxu0 0.0
    %1043 = vmatpush1.msra.mxu0 0.0
    %1044 = vmatprep.subr.mxu0 0.0
    %1045 = vmatpush1.msra.mxu0 0.0
    %1046 = vmatprep.subr.mxu0 0.0
    %1047 = vmatpush1.msra.mxu0 0.0
    %1048 = vmatprep.mubr.f32.mxu0 0.0
    %1049 = vmatmul.mubr.f32.gmra.mrb[0].mxu0 %v177
    %v1050 = vpop.f32.mrb[0].mxu0
    %v1051 = vadd.f32 %v168, %v1050
    %v1052 = vpop.f32.mrb[0].mxu0
    %v1053 = vadd.f32 %v168, %v1052
    %1054 = vmatprep.mubr.f32.mxu0 0.0
    %1055 = vmatmul.mubr.f32.gmra.mrb[0].mxu0 %v180
    %v1056 = vpop.f32.mrb[0].mxu0
    %v1057 = vadd.f32 %v173, %v1056
    %v1058 = vpop.f32.mrb[0].mxu0
    %v1059 = vadd.f32 %v173, %v1058
    %1060 = vdwg.mxu0
    %1061 = vmatprep.subr.mxu0 %v110
    %1062 = vmatpush1.msra.mxu0 %v109
    %1063 = vmatprep.subr.mxu0 %v247
    %1064 = vmatpush1.msra.mxu0 %v244
    %1065 = vmatprep.subr.mxu0 0.0
    %1066 = vmatpush1.msra.mxu0 0.0
    %1067 = vmatprep.subr.mxu0 0.0
    %1068 = vmatpush1.msra.mxu0 0.0
    %1069 = vmatprep.subr.mxu0 0.0
    %1070 = vmatpush1.msra.mxu0 0.0
    %1071 = vmatprep.subr.mxu0 0.0
    %1072 = vmatpush1.msra.mxu0 0.0
    %1073 = vmatprep.subr.mxu0 0.0
    %1074 = vmatpush1.msra.mxu0 0.0
    %1075 = vmatprep.subr.mxu0 0.0
    %1076 = vmatpush1.msra.mxu0 0.0
    %1077 = vmatprep.subr.mxu0 0.0
    %1078 = vmatpush1.msra.mxu0 0.0
    %1079 = vmatprep.subr.mxu0 0.0
    %1080 = vmatpush1.msra.mxu0 0.0
    %1081 = vmatprep.subr.mxu0 0.0
    %1082 = vmatpush1.msra.mxu0 0.0
    %1083 = vmatprep.subr.mxu0 0.0
    %1084 = vmatpush1.msra.mxu0 0.0
    %1085 = vmatprep.subr.mxu0 0.0
    %1086 = vmatpush1.msra.mxu0 0.0
    %1087 = vmatprep.subr.mxu0 0.0
    %1088 = vmatpush1.msra.mxu0 0.0
    %1089 = vmatprep.subr.mxu0 0.0
    %1090 = vmatpush1.msra.mxu0 0.0
    %1091 = vmatprep.subr.mxu0 0.0
    %1092 = vmatpush1.msra.mxu0 0.0
    %1093 = vmatprep.subr.mxu0 0.0
    %1094 = vmatpush1.msra.mxu0 0.0
    %1095 = vmatprep.subr.mxu0 0.0
    %1096 = vmatpush1.msra.mxu0 0.0
    %1097 = vmatprep.subr.mxu0 0.0
    %1098 = vmatpush1.msra.mxu0 0.0
    %1099 = vmatprep.subr.mxu0 0.0
    %1100 = vmatpush1.msra.mxu0 0.0
    %1101 = vmatprep.subr.mxu0 0.0
    %1102 = vmatpush1.msra.mxu0 0.0
    %1103 = vmatprep.subr.mxu0 0.0
    %1104 = vmatpush1.msra.mxu0 0.0
    %1105 = vmatprep.subr.mxu0 0.0
    %1106 = vmatpush1.msra.mxu0 0.0
    %1107 = vmatprep.subr.mxu0 0.0
    %1108 = vmatpush1.msra.mxu0 0.0
    %1109 = vmatprep.subr.mxu0 0.0
    %1110 = vmatpush1.msra.mxu0 0.0
    %1111 = vmatprep.subr.mxu0 0.0
    %1112 = vmatpush1.msra.mxu0 0.0
    %1113 = vmatprep.subr.mxu0 0.0
    %1114 = vmatpush1.msra.mxu0 0.0
    %1115 = vmatprep.subr.mxu0 0.0
    %1116 = vmatpush1.msra.mxu0 0.0
    %1117 = vmatprep.subr.mxu0 0.0
    %1118 = vmatpush1.msra.mxu0 0.0
    %1119 = vmatprep.subr.mxu0 0.0
    %1120 = vmatpush1.msra.mxu0 0.0
    %1121 = vmatprep.subr.mxu0 0.0
    %1122 = vmatpush1.msra.mxu0 0.0
    %1123 = vmatprep.subr.mxu0 0.0
    %1124 = vmatpush1.msra.mxu0 0.0
    %1125 = vmatprep.mubr.f32.mxu0 0.0
    %1126 = vmatmul.mubr.f32.gmra.mrb[0].mxu0 %v177
    %v1127 = vpop.f32.mrb[0].mxu0
    %v1128 = vadd.f32 %v168, %v1127
    %v1129 = vpop.f32.mrb[0].mxu0
    %v1130 = vadd.f32 %v168, %v1129
    %1131 = vmatprep.mubr.f32.mxu0 0.0
    %1132 = vmatmul.mubr.f32.gmra.mrb[0].mxu0 %v180
    %v1133 = vpop.f32.mrb[0].mxu0
    %v1134 = vadd.f32 %v173, %v1133
    %v1135 = vpop.f32.mrb[0].mxu0
    %v1136 = vadd.f32 %v173, %v1135
    %1137 = vdwg.mxu0
    %1138 = vmatprep.subr.mxu0 %v112
    %1139 = vmatpush1.msra.mxu0 %v111
    %1140 = vmatprep.subr.mxu0 %v253
    %1141 = vmatpush1.msra.mxu0 %v250
    %1142 = vmatprep.subr.mxu0 0.0
    %1143 = vmatpush1.msra.mxu0 0.0
    %1144 = vmatprep.subr.mxu0 0.0
    %1145 = vmatpush1.msra.mxu0 0.0
    %1146 = vmatprep.subr.mxu0 0.0
    %1147 = vmatpush1.msra.mxu0 0.0
    %1148 = vmatprep.subr.mxu0 0.0
    %1149 = vmatpush1.msra.mxu0 0.0
    %1150 = vmatprep.subr.mxu0 0.0
    %1151 = vmatpush1.msra.mxu0 0.0
    %1152 = vmatprep.subr.mxu0 0.0
    %1153 = vmatpush1.msra.mxu0 0.0
    %1154 = vmatprep.subr.mxu0 0.0
    %1155 = vmatpush1.msra.mxu0 0.0
    %1156 = vmatprep.subr.mxu0 0.0
    %1157 = vmatpush1.msra.mxu0 0.0
    %1158 = vmatprep.subr.mxu0 0.0
    %1159 = vmatpush1.msra.mxu0 0.0
    %1160 = vmatprep.subr.mxu0 0.0
    %1161 = vmatpush1.msra.mxu0 0.0
    %1162 = vmatprep.subr.mxu0 0.0
    %1163 = vmatpush1.msra.mxu0 0.0
    %1164 = vmatprep.subr.mxu0 0.0
    %1165 = vmatpush1.msra.mxu0 0.0
    %1166 = vmatprep.subr.mxu0 0.0
    %1167 = vmatpush1.msra.mxu0 0.0
    %1168 = vmatprep.subr.mxu0 0.0
    %1169 = vmatpush1.msra.mxu0 0.0
    %1170 = vmatprep.subr.mxu0 0.0
    %1171 = vmatpush1.msra.mxu0 0.0
    %1172 = vmatprep.subr.mxu0 0.0
    %1173 = vmatpush1.msra.mxu0 0.0
    %1174 = vmatprep.subr.mxu0 0.0
    %1175 = vmatpush1.msra.mxu0 0.0
    %1176 = vmatprep.subr.mxu0 0.0
    %1177 = vmatpush1.msra.mxu0 0.0
    %1178 = vmatprep.subr.mxu0 0.0
    %1179 = vmatpush1.msra.mxu0 0.0
    %1180 = vmatprep.subr.mxu0 0.0
    %1181 = vmatpush1.msra.mxu0 0.0
    %1182 = vmatprep.subr.mxu0 0.0
    %1183 = vmatpush1.msra.mxu0 0.0
    %1184 = vmatprep.subr.mxu0 0.0
    %1185 = vmatpush1.msra.mxu0 0.0
    %1186 = vmatprep.subr.mxu0 0.0
    %1187 = vmatpush1.msra.mxu0 0.0
    %1188 = vmatprep.subr.mxu0 0.0
    %1189 = vmatpush1.msra.mxu0 0.0
    %1190 = vmatprep.subr.mxu0 0.0
    %1191 = vmatpush1.msra.mxu0 0.0
    %1192 = vmatprep.subr.mxu0 0.0
    %1193 = vmatpush1.msra.mxu0 0.0
    %1194 = vmatprep.subr.mxu0 0.0
    %1195 = vmatpush1.msra.mxu0 0.0
    %1196 = vmatprep.subr.mxu0 0.0
    %1197 = vmatpush1.msra.mxu0 0.0
    %1198 = vmatprep.subr.mxu0 0.0
    %1199 = vmatpush1.msra.mxu0 0.0
    %1200 = vmatprep.subr.mxu0 0.0
    %1201 = vmatpush1.msra.mxu0 0.0
    %1202 = vmatprep.mubr.f32.mxu0 0.0
    %1203 = vmatmul.mubr.f32.gmra.mrb[0].mxu0 %v177
    %v1204 = vpop.f32.mrb[0].mxu0
    %v1205 = vadd.f32 %v168, %v1204
    %v1206 = vpop.f32.mrb[0].mxu0
    %v1207 = vadd.f32 %v168, %v1206
    %1208 = vmatprep.mubr.f32.mxu0 0.0
    %1209 = vmatmul.mubr.f32.gmra.mrb[0].mxu0 %v180
    %v1210 = vpop.f32.mrb[0].mxu0
    %v1211 = vadd.f32 %v173, %v1210
    %v1212 = vpop.f32.mrb[0].mxu0
    %v1213 = vadd.f32 %v173, %v1212
    %1214 = vdwg.mxu0
    %1215 = vmatprep.subr.mxu0 %v114
    %1216 = vmatpush1.msra.mxu0 %v113
    %1217 = vmatprep.subr.mxu0 %v259
    %1218 = vmatpush1.msra.mxu0 %v256
    %1219 = vmatprep.subr.mxu0 0.0
    %1220 = vmatpush1.msra.mxu0 0.0
    %1221 = vmatprep.subr.mxu0 0.0
    %1222 = vmatpush1.msra.mxu0 0.0
    %1223 = vmatprep.subr.mxu0 0.0
    %1224 = vmatpush1.msra.mxu0 0.0
    %1225 = vmatprep.subr.mxu0 0.0
    %1226 = vmatpush1.msra.mxu0 0.0
    %1227 = vmatprep.subr.mxu0 0.0
    %1228 = vmatpush1.msra.mxu0 0.0
    %1229 = vmatprep.subr.mxu0 0.0
    %1230 = vmatpush1.msra.mxu0 0.0
    %1231 = vmatprep.subr.mxu0 0.0
    %1232 = vmatpush1.msra.mxu0 0.0
    %1233 = vmatprep.subr.mxu0 0.0
    %1234 = vmatpush1.msra.mxu0 0.0
    %1235 = vmatprep.subr.mxu0 0.0
    %1236 = vmatpush1.msra.mxu0 0.0
    %1237 = vmatprep.subr.mxu0 0.0
    %1238 = vmatpush1.msra.mxu0 0.0
    %1239 = vmatprep.subr.mxu0 0.0
    %1240 = vmatpush1.msra.mxu0 0.0
    %1241 = vmatprep.subr.mxu0 0.0
    %1242 = vmatpush1.msra.mxu0 0.0
    %1243 = vmatprep.subr.mxu0 0.0
    %1244 = vmatpush1.msra.mxu0 0.0
    %1245 = vmatprep.subr.mxu0 0.0
    %1246 = vmatpush1.msra.mxu0 0.0
    %1247 = vmatprep.subr.mxu0 0.0
    %1248 = vmatpush1.msra.mxu0 0.0
    %1249 = vmatprep.subr.mxu0 0.0
    %1250 = vmatpush1.msra.mxu0 0.0
    %1251 = vmatprep.subr.mxu0 0.0
    %1252 = vmatpush1.msra.mxu0 0.0
    %1253 = vmatprep.subr.mxu0 0.0
    %1254 = vmatpush1.msra.mxu0 0.0
    %1255 = vmatprep.subr.mxu0 0.0
    %1256 = vmatpush1.msra.mxu0 0.0
    %1257 = vmatprep.subr.mxu0 0.0
    %1258 = vmatpush1.msra.mxu0 0.0
    %1259 = vmatprep.subr.mxu0 0.0
    %1260 = vmatpush1.msra.mxu0 0.0
    %1261 = vmatprep.subr.mxu0 0.0
    %1262 = vmatpush1.msra.mxu0 0.0
    %1263 = vmatprep.subr.mxu0 0.0
    %1264 = vmatpush1.msra.mxu0 0.0
    %1265 = vmatprep.subr.mxu0 0.0
    %1266 = vmatpush1.msra.mxu0 0.0
    %1267 = vmatprep.subr.mxu0 0.0
    %1268 = vmatpush1.msra.mxu0 0.0
    %1269 = vmatprep.subr.mxu0 0.0
    %1270 = vmatpush1.msra.mxu0 0.0
    %1271 = vmatprep.subr.mxu0 0.0
    %1272 = vmatpush1.msra.mxu0 0.0
    %1273 = vmatprep.subr.mxu0 0.0
    %1274 = vmatpush1.msra.mxu0 0.0
    %1275 = vmatprep.subr.mxu0 0.0
    %1276 = vmatpush1.msra.mxu0 0.0
    %1277 = vmatprep.subr.mxu0 0.0
    %1278 = vmatpush1.msra.mxu0 0.0
    %1279 = vmatprep.mubr.f32.mxu0 0.0
    %1280 = vmatmul.mubr.f32.gmra.mrb[0].mxu0 %v177
    %v1281 = vpop.f32.mrb[0].mxu0
    %v1282 = vadd.f32 %v168, %v1281
    %v1283 = vpop.f32.mrb[0].mxu0
    %v1284 = vadd.f32 %v168, %v1283
    %1285 = vmatprep.mubr.f32.mxu0 0.0
    %1286 = vmatmul.mubr.f32.gmra.mrb[0].mxu0 %v180
    %v1287 = vpop.f32.mrb[0].mxu0
    %v1288 = vadd.f32 %v173, %v1287
    %v1289 = vpop.f32.mrb[0].mxu0
    %v1290 = vadd.f32 %v173, %v1289
    %1291 = vdwg.mxu0
    %1292 = vmatprep.subr.mxu0 %v116
    %1293 = vmatpush1.msra.mxu0 %v115
    %1294 = vmatprep.subr.mxu0 %v265
    %1295 = vmatpush1.msra.mxu0 %v262
    %1296 = vmatprep.subr.mxu0 0.0
    %1297 = vmatpush1.msra.mxu0 0.0
    %1298 = vmatprep.subr.mxu0 0.0
    %1299 = vmatpush1.msra.mxu0 0.0
    %1300 = vmatprep.subr.mxu0 0.0
    %1301 = vmatpush1.msra.mxu0 0.0
    %1302 = vmatprep.subr.mxu0 0.0
    %1303 = vmatpush1.msra.mxu0 0.0
    %1304 = vmatprep.subr.mxu0 0.0
    %1305 = vmatpush1.msra.mxu0 0.0
    %1306 = vmatprep.subr.mxu0 0.0
    %1307 = vmatpush1.msra.mxu0 0.0
    %1308 = vmatprep.subr.mxu0 0.0
    %1309 = vmatpush1.msra.mxu0 0.0
    %1310 = vmatprep.subr.mxu0 0.0
    %1311 = vmatpush1.msra.mxu0 0.0
    %1312 = vmatprep.subr.mxu0 0.0
    %1313 = vmatpush1.msra.mxu0 0.0
    %1314 = vmatprep.subr.mxu0 0.0
    %1315 = vmatpush1.msra.mxu0 0.0
    %1316 = vmatprep.subr.mxu0 0.0
    %1317 = vmatpush1.msra.mxu0 0.0
    %1318 = vmatprep.subr.mxu0 0.0
    %1319 = vmatpush1.msra.mxu0 0.0
    %1320 = vmatprep.subr.mxu0 0.0
    %1321 = vmatpush1.msra.mxu0 0.0
    %1322 = vmatprep.subr.mxu0 0.0
    %1323 = vmatpush1.msra.mxu0 0.0
    %1324 = vmatprep.subr.mxu0 0.0
    %1325 = vmatpush1.msra.mxu0 0.0
    %1326 = vmatprep.subr.mxu0 0.0
    %1327 = vmatpush1.msra.mxu0 0.0
    %1328 = vmatprep.subr.mxu0 0.0
    %1329 = vmatpush1.msra.mxu0 0.0
    %1330 = vmatprep.subr.mxu0 0.0
    %1331 = vmatpush1.msra.mxu0 0.0
    %1332 = vmatprep.subr.mxu0 0.0
    %1333 = vmatpush1.msra.mxu0 0.0
    %1334 = vmatprep.subr.mxu0 0.0
    %1335 = vmatpush1.msra.mxu0 0.0
    %1336 = vmatprep.subr.mxu0 0.0
    %1337 = vmatpush1.msra.mxu0 0.0
    %1338 = vmatprep.subr.mxu0 0.0
    %1339 = vmatpush1.msra.mxu0 0.0
    %1340 = vmatprep.subr.mxu0 0.0
    %1341 = vmatpush1.msra.mxu0 0.0
    %1342 = vmatprep.subr.mxu0 0.0
    %1343 = vmatpush1.msra.mxu0 0.0
    %1344 = vmatprep.subr.mxu0 0.0
    %1345 = vmatpush1.msra.mxu0 0.0
    %1346 = vmatprep.subr.mxu0 0.0
    %1347 = vmatpush1.msra.mxu0 0.0
    %1348 = vmatprep.subr.mxu0 0.0
    %1349 = vmatpush1.msra.mxu0 0.0
    %1350 = vmatprep.subr.mxu0 0.0
    %1351 = vmatpush1.msra.mxu0 0.0
    %1352 = vmatprep.subr.mxu0 0.0
    %1353 = vmatpush1.msra.mxu0 0.0
    %1354 = vmatprep.subr.mxu0 0.0
    %1355 = vmatpush1.msra.mxu0 0.0
    %1356 = vmatprep.mubr.f32.mxu0 0.0
    %1357 = vmatmul.mubr.f32.gmra.mrb[0].mxu0 %v177
    %v1358 = vpop.f32.mrb[0].mxu0
    %v1359 = vadd.f32 %v168, %v1358
    %v1360 = vpop.f32.mrb[0].mxu0
    %v1361 = vadd.f32 %v168, %v1360
    %1362 = vmatprep.mubr.f32.mxu0 0.0
    %1363 = vmatmul.mubr.f32.gmra.mrb[0].mxu0 %v180
    %v1364 = vpop.f32.mrb[0].mxu0
    %v1365 = vadd.f32 %v173, %v1364
    %v1366 = vpop.f32.mrb[0].mxu0
    %v1367 = vadd.f32 %v173, %v1366
    %1368 = vdwg.mxu0
    %1369 = vmatprep.subr.mxu0 %v118
    %1370 = vmatpush1.msra.mxu0 %v117
    %1371 = vmatprep.subr.mxu0 %v271
    %1372 = vmatpush1.msra.mxu0 %v268
    %1373 = vmatprep.subr.mxu0 0.0
    %1374 = vmatpush1.msra.mxu0 0.0
    %1375 = vmatprep.subr.mxu0 0.0
    %1376 = vmatpush1.msra.mxu0 0.0
    %1377 = vmatprep.subr.mxu0 0.0
    %1378 = vmatpush1.msra.mxu0 0.0
    %1379 = vmatprep.subr.mxu0 0.0
    %1380 = vmatpush1.msra.mxu0 0.0
    %1381 = vmatprep.subr.mxu0 0.0
    %1382 = vmatpush1.msra.mxu0 0.0
    %1383 = vmatprep.subr.mxu0 0.0
    %1384 = vmatpush1.msra.mxu0 0.0
    %1385 = vmatprep.subr.mxu0 0.0
    %1386 = vmatpush1.msra.mxu0 0.0
    %1387 = vmatprep.subr.mxu0 0.0
    %1388 = vmatpush1.msra.mxu0 0.0
    %1389 = vmatprep.subr.mxu0 0.0
    %1390 = vmatpush1.msra.mxu0 0.0
    %1391 = vmatprep.subr.mxu0 0.0
    %1392 = vmatpush1.msra.mxu0 0.0
    %1393 = vmatprep.subr.mxu0 0.0
    %1394 = vmatpush1.msra.mxu0 0.0
    %1395 = vmatprep.subr.mxu0 0.0
    %1396 = vmatpush1.msra.mxu0 0.0
    %1397 = vmatprep.subr.mxu0 0.0
    %1398 = vmatpush1.msra.mxu0 0.0
    %1399 = vmatprep.subr.mxu0 0.0
    %1400 = vmatpush1.msra.mxu0 0.0
    %1401 = vmatprep.subr.mxu0 0.0
    %1402 = vmatpush1.msra.mxu0 0.0
    %1403 = vmatprep.subr.mxu0 0.0
    %1404 = vmatpush1.msra.mxu0 0.0
    %1405 = vmatprep.subr.mxu0 0.0
    %1406 = vmatpush1.msra.mxu0 0.0
    %1407 = vmatprep.subr.mxu0 0.0
    %1408 = vmatpush1.msra.mxu0 0.0
    %1409 = vmatprep.subr.mxu0 0.0
    %1410 = vmatpush1.msra.mxu0 0.0
    %1411 = vmatprep.subr.mxu0 0.0
    %1412 = vmatpush1.msra.mxu0 0.0
    %1413 = vmatprep.subr.mxu0 0.0
    %1414 = vmatpush1.msra.mxu0 0.0
    %1415 = vmatprep.subr.mxu0 0.0
    %1416 = vmatpush1.msra.mxu0 0.0
    %1417 = vmatprep.subr.mxu0 0.0
    %1418 = vmatpush1.msra.mxu0 0.0
    %1419 = vmatprep.subr.mxu0 0.0
    %1420 = vmatpush1.msra.mxu0 0.0
    %1421 = vmatprep.subr.mxu0 0.0
    %1422 = vmatpush1.msra.mxu0 0.0
    %1423 = vmatprep.subr.mxu0 0.0
    %1424 = vmatpush1.msra.mxu0 0.0
    %1425 = vmatprep.subr.mxu0 0.0
    %1426 = vmatpush1.msra.mxu0 0.0
    %1427 = vmatprep.subr.mxu0 0.0
    %1428 = vmatpush1.msra.mxu0 0.0
    %1429 = vmatprep.subr.mxu0 0.0
    %1430 = vmatpush1.msra.mxu0 0.0
    %1431 = vmatprep.subr.mxu0 0.0
    %1432 = vmatpush1.msra.mxu0 0.0
    %1433 = vmatprep.mubr.f32.mxu0 0.0
    %1434 = vmatmul.mubr.f32.gmra.mrb[0].mxu0 %v177
    %v1435 = vpop.f32.mrb[0].mxu0
    %v1436 = vadd.f32 %v168, %v1435
    %v1437 = vpop.f32.mrb[0].mxu0
    %v1438 = vadd.f32 %v168, %v1437
    %1439 = vmatprep.mubr.f32.mxu0 0.0
    %1440 = vmatmul.mubr.f32.gmra.mrb[0].mxu0 %v180
    %v1441 = vpop.f32.mrb[0].mxu0
    %v1442 = vadd.f32 %v173, %v1441
    %v1443 = vpop.f32.mrb[0].mxu0
    %v1444 = vadd.f32 %v173, %v1443
    %1445 = vdwg.mxu0
    %1446 = vmatprep.subr.mxu0 %v120
    %1447 = vmatpush1.msra.mxu0 %v119
    %1448 = vmatprep.subr.mxu0 %v277
    %1449 = vmatpush1.msra.mxu0 %v274
    %1450 = vmatprep.subr.mxu0 0.0
    %1451 = vmatpush1.msra.mxu0 0.0
    %1452 = vmatprep.subr.mxu0 0.0
    %1453 = vmatpush1.msra.mxu0 0.0
    %1454 = vmatprep.subr.mxu0 0.0
    %1455 = vmatpush1.msra.mxu0 0.0
    %1456 = vmatprep.subr.mxu0 0.0
    %1457 = vmatpush1.msra.mxu0 0.0
    %1458 = vmatprep.subr.mxu0 0.0
    %1459 = vmatpush1.msra.mxu0 0.0
    %1460 = vmatprep.subr.mxu0 0.0
    %1461 = vmatpush1.msra.mxu0 0.0
    %1462 = vmatprep.subr.mxu0 0.0
    %1463 = vmatpush1.msra.mxu0 0.0
    %1464 = vmatprep.subr.mxu0 0.0
    %1465 = vmatpush1.msra.mxu0 0.0
    %1466 = vmatprep.subr.mxu0 0.0
    %1467 = vmatpush1.msra.mxu0 0.0
    %1468 = vmatprep.subr.mxu0 0.0
    %1469 = vmatpush1.msra.mxu0 0.0
    %1470 = vmatprep.subr.mxu0 0.0
    %1471 = vmatpush1.msra.mxu0 0.0
    %1472 = vmatprep.subr.mxu0 0.0
    %1473 = vmatpush1.msra.mxu0 0.0
    %1474 = vmatprep.subr.mxu0 0.0
    %1475 = vmatpush1.msra.mxu0 0.0
    %1476 = vmatprep.subr.mxu0 0.0
    %1477 = vmatpush1.msra.mxu0 0.0
    %1478 = vmatprep.subr.mxu0 0.0
    %1479 = vmatpush1.msra.mxu0 0.0
    %1480 = vmatprep.subr.mxu0 0.0
    %1481 = vmatpush1.msra.mxu0 0.0
    %1482 = vmatprep.subr.mxu0 0.0
    %1483 = vmatpush1.msra.mxu0 0.0
    %1484 = vmatprep.subr.mxu0 0.0
    %1485 = vmatpush1.msra.mxu0 0.0
    %1486 = vmatprep.subr.mxu0 0.0
    %1487 = vmatpush1.msra.mxu0 0.0
    %1488 = vmatprep.subr.mxu0 0.0
    %1489 = vmatpush1.msra.mxu0 0.0
    %1490 = vmatprep.subr.mxu0 0.0
    %1491 = vmatpush1.msra.mxu0 0.0
    %1492 = vmatprep.subr.mxu0 0.0
    %1493 = vmatpush1.msra.mxu0 0.0
    %1494 = vmatprep.subr.mxu0 0.0
    %1495 = vmatpush1.msra.mxu0 0.0
    %1496 = vmatprep.subr.mxu0 0.0
    %1497 = vmatpush1.msra.mxu0 0.0
    %1498 = vmatprep.subr.mxu0 0.0
    %1499 = vmatpush1.msra.mxu0 0.0
    %1500 = vmatprep.subr.mxu0 0.0
    %1501 = vmatpush1.msra.mxu0 0.0
    %1502 = vmatprep.subr.mxu0 0.0
    %1503 = vmatpush1.msra.mxu0 0.0
    %1504 = vmatprep.subr.mxu0 0.0
    %1505 = vmatpush1.msra.mxu0 0.0
    %1506 = vmatprep.subr.mxu0 0.0
    %1507 = vmatpush1.msra.mxu0 0.0
    %1508 = vmatprep.subr.mxu0 0.0
    %1509 = vmatpush1.msra.mxu0 0.0
    %1510 = vmatprep.mubr.f32.mxu0 0.0
    %1511 = vmatmul.mubr.f32.gmra.mrb[0].mxu0 %v177
    %v1512 = vpop.f32.mrb[0].mxu0
    %v1513 = vadd.f32 %v168, %v1512
    %v1514 = vpop.f32.mrb[0].mxu0
    %v1515 = vadd.f32 %v168, %v1514
    %1516 = vmatprep.mubr.f32.mxu0 0.0
    %1517 = vmatmul.mubr.f32.gmra.mrb[0].mxu0 %v180
    %v1518 = vpop.f32.mrb[0].mxu0
    %v1519 = vadd.f32 %v173, %v1518
    %v1520 = vpop.f32.mrb[0].mxu0
    %v1521 = vadd.f32 %v173, %v1520
    %1522 = vdwg.mxu0
    %1523 = vmatprep.subr.mxu0 %v122
    %1524 = vmatpush1.msra.mxu0 %v121
    %1525 = vmatprep.subr.mxu0 %v283
    %1526 = vmatpush1.msra.mxu0 %v280
    %1527 = vmatprep.subr.mxu0 0.0
    %1528 = vmatpush1.msra.mxu0 0.0
    %1529 = vmatprep.subr.mxu0 0.0
    %1530 = vmatpush1.msra.mxu0 0.0
    %1531 = vmatprep.subr.mxu0 0.0
    %1532 = vmatpush1.msra.mxu0 0.0
    %1533 = vmatprep.subr.mxu0 0.0
    %1534 = vmatpush1.msra.mxu0 0.0
    %1535 = vmatprep.subr.mxu0 0.0
    %1536 = vmatpush1.msra.mxu0 0.0
    %1537 = vmatprep.subr.mxu0 0.0
    %1538 = vmatpush1.msra.mxu0 0.0
    %1539 = vmatprep.subr.mxu0 0.0
    %1540 = vmatpush1.msra.mxu0 0.0
    %1541 = vmatprep.subr.mxu0 0.0
    %1542 = vmatpush1.msra.mxu0 0.0
    %1543 = vmatprep.subr.mxu0 0.0
    %1544 = vmatpush1.msra.mxu0 0.0
    %1545 = vmatprep.subr.mxu0 0.0
    %1546 = vmatpush1.msra.mxu0 0.0
    %1547 = vmatprep.subr.mxu0 0.0
    %1548 = vmatpush1.msra.mxu0 0.0
    %1549 = vmatprep.subr.mxu0 0.0
    %1550 = vmatpush1.msra.mxu0 0.0
    %1551 = vmatprep.subr.mxu0 0.0
    %1552 = vmatpush1.msra.mxu0 0.0
    %1553 = vmatprep.subr.mxu0 0.0
    %1554 = vmatpush1.msra.mxu0 0.0
    %1555 = vmatprep.subr.mxu0 0.0
    %1556 = vmatpush1.msra.mxu0 0.0
    %1557 = vmatprep.subr.mxu0 0.0
    %1558 = vmatpush1.msra.mxu0 0.0
    %1559 = vmatprep.subr.mxu0 0.0
    %1560 = vmatpush1.msra.mxu0 0.0
    %1561 = vmatprep.subr.mxu0 0.0
    %1562 = vmatpush1.msra.mxu0 0.0
    %1563 = vmatprep.subr.mxu0 0.0
    %1564 = vmatpush1.msra.mxu0 0.0
    %1565 = vmatprep.subr.mxu0 0.0
    %1566 = vmatpush1.msra.mxu0 0.0
    %1567 = vmatprep.subr.mxu0 0.0
    %1568 = vmatpush1.msra.mxu0 0.0
    %1569 = vmatprep.subr.mxu0 0.0
    %1570 = vmatpush1.msra.mxu0 0.0
    %1571 = vmatprep.subr.mxu0 0.0
    %1572 = vmatpush1.msra.mxu0 0.0
    %1573 = vmatprep.subr.mxu0 0.0
    %1574 = vmatpush1.msra.mxu0 0.0
    %1575 = vmatprep.subr.mxu0 0.0
    %1576 = vmatpush1.msra.mxu0 0.0
    %1577 = vmatprep.subr.mxu0 0.0
    %1578 = vmatpush1.msra.mxu0 0.0
    %1579 = vmatprep.subr.mxu0 0.0
    %1580 = vmatpush1.msra.mxu0 0.0
    %1581 = vmatprep.subr.mxu0 0.0
    %1582 = vmatpush1.msra.mxu0 0.0
    %1583 = vmatprep.subr.mxu0 0.0
    %1584 = vmatpush1.msra.mxu0 0.0
    %1585 = vmatprep.subr.mxu0 0.0
    %1586 = vmatpush1.msra.mxu0 0.0
    %1587 = vmatprep.mubr.f32.mxu0 0.0
    %1588 = vmatmul.mubr.f32.gmra.mrb[0].mxu0 %v177
    %v1589 = vpop.f32.mrb[0].mxu0
    %v1590 = vadd.f32 %v168, %v1589
    %v1591 = vpop.f32.mrb[0].mxu0
    %v1592 = vadd.f32 %v168, %v1591
    %1593 = vmatprep.mubr.f32.mxu0 0.0
    %1594 = vmatmul.mubr.f32.gmra.mrb[0].mxu0 %v180
    %v1595 = vpop.f32.mrb[0].mxu0
    %v1596 = vadd.f32 %v173, %v1595
    %v1597 = vpop.f32.mrb[0].mxu0
    %v1598 = vadd.f32 %v173, %v1597
    %1599 = vdwg.mxu0
    %1600 = vmatprep.subr.mxu0 %v124
    %1601 = vmatpush1.msra.mxu0 %v123
    %1602 = vmatprep.subr.mxu0 %v289
    %1603 = vmatpush1.msra.mxu0 %v286
    %1604 = vmatprep.subr.mxu0 0.0
    %1605 = vmatpush1.msra.mxu0 0.0
    %1606 = vmatprep.subr.mxu0 0.0
    %1607 = vmatpush1.msra.mxu0 0.0
    %1608 = vmatprep.subr.mxu0 0.0
    %1609 = vmatpush1.msra.mxu0 0.0
    %1610 = vmatprep.subr.mxu0 0.0
    %1611 = vmatpush1.msra.mxu0 0.0
    %1612 = vmatprep.subr.mxu0 0.0
    %1613 = vmatpush1.msra.mxu0 0.0
    %1614 = vmatprep.subr.mxu0 0.0
    %1615 = vmatpush1.msra.mxu0 0.0
    %1616 = vmatprep.subr.mxu0 0.0
    %1617 = vmatpush1.msra.mxu0 0.0
    %1618 = vmatprep.subr.mxu0 0.0
    %1619 = vmatpush1.msra.mxu0 0.0
    %1620 = vmatprep.subr.mxu0 0.0
    %1621 = vmatpush1.msra.mxu0 0.0
    %1622 = vmatprep.subr.mxu0 0.0
    %1623 = vmatpush1.msra.mxu0 0.0
    %1624 = vmatprep.subr.mxu0 0.0
    %1625 = vmatpush1.msra.mxu0 0.0
    %1626 = vmatprep.subr.mxu0 0.0
    %1627 = vmatpush1.msra.mxu0 0.0
    %1628 = vmatprep.subr.mxu0 0.0
    %1629 = vmatpush1.msra.mxu0 0.0
    %1630 = vmatprep.subr.mxu0 0.0
    %1631 = vmatpush1.msra.mxu0 0.0
    %1632 = vmatprep.subr.mxu0 0.0
    %1633 = vmatpush1.msra.mxu0 0.0
    %1634 = vmatprep.subr.mxu0 0.0
    %1635 = vmatpush1.msra.mxu0 0.0
    %1636 = vmatprep.subr.mxu0 0.0
    %1637 = vmatpush1.msra.mxu0 0.0
    %1638 = vmatprep.subr.mxu0 0.0
    %1639 = vmatpush1.msra.mxu0 0.0
    %1640 = vmatprep.subr.mxu0 0.0
    %1641 = vmatpush1.msra.mxu0 0.0
    %1642 = vmatprep.subr.mxu0 0.0
    %1643 = vmatpush1.msra.mxu0 0.0
    %1644 = vmatprep.subr.mxu0 0.0
    %1645 = vmatpush1.msra.mxu0 0.0
    %1646 = vmatprep.subr.mxu0 0.0
    %1647 = vmatpush1.msra.mxu0 0.0
    %1648 = vmatprep.subr.mxu0 0.0
    %1649 = vmatpush1.msra.mxu0 0.0
    %1650 = vmatprep.subr.mxu0 0.0
    %1651 = vmatpush1.msra.mxu0 0.0
    %1652 = vmatprep.subr.mxu0 0.0
    %1653 = vmatpush1.msra.mxu0 0.0
    %1654 = vmatprep.subr.mxu0 0.0
    %1655 = vmatpush1.msra.mxu0 0.0
    %1656 = vmatprep.subr.mxu0 0.0
    %1657 = vmatpush1.msra.mxu0 0.0
    %1658 = vmatprep.subr.mxu0 0.0
    %1659 = vmatpush1.msra.mxu0 0.0
    %1660 = vmatprep.subr.mxu0 0.0
    %1661 = vmatpush1.msra.mxu0 0.0
    %1662 = vmatprep.subr.mxu0 0.0
    %1663 = vmatpush1.msra.mxu0 0.0
    %1664 = vmatprep.mubr.f32.mxu0 0.0
    %1665 = vmatmul.mubr.f32.gmra.mrb[0].mxu0 %v177
    %v1666 = vpop.f32.mrb[0].mxu0
    %v1667 = vadd.f32 %v168, %v1666
    %v1668 = vpop.f32.mrb[0].mxu0
    %v1669 = vadd.f32 %v168, %v1668
    %1670 = vmatprep.mubr.f32.mxu0 0.0
    %1671 = vmatmul.mubr.f32.gmra.mrb[0].mxu0 %v180
    %v1672 = vpop.f32.mrb[0].mxu0
    %v1673 = vadd.f32 %v173, %v1672
    %v1674 = vpop.f32.mrb[0].mxu0
    %v1675 = vadd.f32 %v173, %v1674
    %1676 = vdwg.mxu0
    %v1677 = vmax.f32 %v358, 0.0
    %v1678 = vmax.f32 %v360, 0.0
    %v1679 = vmax.f32 %v435, 0.0
    %v1680 = vmax.f32 %v437, 0.0
    %v1681 = vmax.f32 %v512, 0.0
    %v1682 = vmax.f32 %v514, 0.0
    %v1683 = vmax.f32 %v589, 0.0
    %v1684 = vmax.f32 %v591, 0.0
    %v1685 = vmax.f32 %v666, 0.0
    %v1686 = vmax.f32 %v668, 0.0
    %v1687 = vmax.f32 %v743, 0.0
    %v1688 = vmax.f32 %v745, 0.0
    %v1689 = vmax.f32 %v820, 0.0
    %v1690 = vmax.f32 %v822, 0.0
    %v1691 = vmax.f32 %v897, 0.0
    %v1692 = vmax.f32 %v899, 0.0
    %v1693 = vmax.f32 %v974, 0.0
    %v1694 = vmax.f32 %v976, 0.0
    %v1695 = vmax.f32 %v1051, 0.0
    %v1696 = vmax.f32 %v1053, 0.0
    %v1697 = vmax.f32 %v1128, 0.0
    %v1698 = vmax.f32 %v1130, 0.0
    %v1699 = vmax.f32 %v1205, 0.0
    %v1700 = vmax.f32 %v1207, 0.0
    %v1701 = vmax.f32 %v1282, 0.0
    %v1702 = vmax.f32 %v1284, 0.0
    %v1703 = vmax.f32 %v1359, 0.0
    %v1704 = vmax.f32 %v1361, 0.0
    %v1705 = vmax.f32 %v1436, 0.0
    %v1706 = vmax.f32 %v1438, 0.0
    %v1707 = vmax.f32 %v1513, 0.0
    %v1708 = vmax.f32 %v1515, 0.0
    %v1709 = vmax.f32 %v1590, 0.0
    %v1710 = vmax.f32 %v1592, 0.0
    %v1711 = vmax.f32 %v1667, 0.0
    %v1712 = vmax.f32 %v1669, 0.0
    %v1713 = vmax.f32 %v364, 0.0
    %v1714 = vmax.f32 %v366, 0.0
    %v1715 = vmax.f32 %v441, 0.0
    %v1716 = vmax.f32 %v443, 0.0
    %v1717 = vmax.f32 %v518, 0.0
    %v1718 = vmax.f32 %v520, 0.0
    %v1719 = vmax.f32 %v595, 0.0
    %v1720 = vmax.f32 %v597, 0.0
    %v1721 = vmax.f32 %v672, 0.0
    %v1722 = vmax.f32 %v674, 0.0
    %v1723 = vmax.f32 %v749, 0.0
    %v1724 = vmax.f32 %v751, 0.0
    %v1725 = vmax.f32 %v826, 0.0
    %v1726 = vmax.f32 %v828, 0.0
    %v1727 = vmax.f32 %v903, 0.0
    %v1728 = vmax.f32 %v905, 0.0
    %v1729 = vmax.f32 %v980, 0.0
    %v1730 = vmax.f32 %v982, 0.0
    %v1731 = vmax.f32 %v1057, 0.0
    %v1732 = vmax.f32 %v1059, 0.0
    %v1733 = vmax.f32 %v1134, 0.0
    %v1734 = vmax.f32 %v1136, 0.0
    %v1735 = vmax.f32 %v1211, 0.0
    %v1736 = vmax.f32 %v1213, 0.0
    %v1737 = vmax.f32 %v1288, 0.0
    %v1738 = vmax.f32 %v1290, 0.0
    %v1739 = vmax.f32 %v1365, 0.0
    %v1740 = vmax.f32 %v1367, 0.0
    %v1741 = vmax.f32 %v1442, 0.0
    %v1742 = vmax.f32 %v1444, 0.0
    %v1743 = vmax.f32 %v1519, 0.0
    %v1744 = vmax.f32 %v1521, 0.0
    %v1745 = vmax.f32 %v1596, 0.0
    %v1746 = vmax.f32 %v1598, 0.0
    %v1747 = vmax.f32 %v1673, 0.0
    %v1748 = vmax.f32 %v1675, 0.0
    %v1749 = vmax.f32 %v1677, %v1678
    %v1750 = vmax.f32 %v1713, %v1714
    %v1751 = vmax.f32 %v1749, %v1683
    %v1752 = vmax.f32 %v1750, %v1719
    %v1753 = vmax.f32 %v1751, %v1684
    %v1754 = vmax.f32 %v1752, %v1720
    %v1755 = vmax.f32 %v1679, %v1680
    %v1756 = vmax.f32 %v1715, %v1716
    %v1757 = vmax.f32 %v1755, %v1685
    %v1758 = vmax.f32 %v1756, %v1721
    %v1759 = vmax.f32 %v1757, %v1686
    %v1760 = vmax.f32 %v1758, %v1722
    %v1761 = vmax.f32 %v1681, %v1682
    %v1762 = vmax.f32 %v1717, %v1718
    %v1763 = vmax.f32 %v1761, %v1687
    %v1764 = vmax.f32 %v1762, %v1723
    %v1765 = vmax.f32 %v1763, %v1688
    %v1766 = vmax.f32 %v1764, %v1724
    %v1767 = vmax.f32 %v1689, %v1690
    %v1768 = vmax.f32 %v1725, %v1726
    %v1769 = vmax.f32 %v1767, %v1695
    %v1770 = vmax.f32 %v1768, %v1731
    %v1771 = vmax.f32 %v1769, %v1696
    %v1772 = vmax.f32 %v1770, %v1732
    %v1773 = vmax.f32 %v1691, %v1692
    %v1774 = vmax.f32 %v1727, %v1728
    %v1775 = vmax.f32 %v1773, %v1697
    %v1776 = vmax.f32 %v1774, %v1733
    %v1777 = vmax.f32 %v1775, %v1698
    %v1778 = vmax.f32 %v1776, %v1734
    %v1779 = vmax.f32 %v1693, %v1694
    %v1780 = vmax.f32 %v1729, %v1730
    %v1781 = vmax.f32 %v1779, %v1699
    %v1782 = vmax.f32 %v1780, %v1735
    %v1783 = vmax.f32 %v1781, %v1700
    %v1784 = vmax.f32 %v1782, %v1736
    %v1785 = vmax.f32 %v1701, %v1702
    %v1786 = vmax.f32 %v1737, %v1738
    %v1787 = vmax.f32 %v1785, %v1707
    %v1788 = vmax.f32 %v1786, %v1743
    %v1789 = vmax.f32 %v1787, %v1708
    %v1790 = vmax.f32 %v1788, %v1744
    %v1791 = vmax.f32 %v1703, %v1704
    %v1792 = vmax.f32 %v1739, %v1740
    %v1793 = vmax.f32 %v1791, %v1709
    %v1794 = vmax.f32 %v1792, %v1745
    %v1795 = vmax.f32 %v1793, %v1710
    %v1796 = vmax.f32 %v1794, %v1746
    %v1797 = vmax.f32 %v1705, %v1706
    %v1798 = vmax.f32 %v1741, %v1742
    %v1799 = vmax.f32 %v1797, %v1711
    %v1800 = vmax.f32 %v1798, %v1747
    %v1801 = vmax.f32 %v1799, %v1712
    %v1802 = vmax.f32 %v1800, %v1748
    %v1803 = vld [vmem:[%s3] sm:$0xff]
    %v1804 = vld [vmem:[%s3 + $0x8] sm:$0xff]
    %v1805 = vld [vmem:[%s3 + $0x10] sm:$0xff]
    %v1806 = vld [vmem:[%s3 + $0x18] sm:$0xff]
    %v1807 = vld [vmem:[%s4] sm:$0xff]
    %v1808 = vld [vmem:[%s4 + $0x8] sm:$0xff]
    %v1809 = vld [vmem:[%s4 + $0x10] sm:$0xff]
    %v1810 = vld [vmem:[%s4 + $0x18] sm:$0xff]
    %1812 = vset.pattern.permute.xlu0 0
    %1813 = vperm.xlu0 %1812, %v1807
    %v1814 = vpop.permute.xlu0 %1813
    %1817 = vset.pattern.permute.xlu0 0
    %1818 = vperm.xlu0 %1817, %v1808
    %v1819 = vpop.permute.xlu0 %1818
    %1822 = vset.pattern.permute.xlu0 0
    %1823 = vperm.xlu0 %1822, %v1809
    %v1824 = vpop.permute.xlu0 %1823
    %1827 = vset.pattern.permute.xlu0 0
    %1828 = vperm.xlu0 %1827, %v1810
    %v1829 = vpop.permute.xlu0 %1828
    %vm1831 = vcmask 523264
    %v1833 = vsel %vm1831, %v1803, 0
    %v1836 = vsel %vm1831, %v1804, 0
    %v1839 = vsel %vm1831, %v1805, 0
    %v1842 = vsel %vm1831, %v1806, 0
    %1844 = vmatprep.subr.mxu0 0.0
    %1845 = vmatpush1.msra.mxu0 %v1753
    %1846 = vmatprep.subr.mxu0 0.0
    %1847 = vmatpush1.msra.mxu0 %v1754
    %1848 = vmatprep.subr.mxu0 0.0
    %1849 = vmatpush1.msra.mxu0 %v1759
    %1850 = vmatprep.subr.mxu0 0.0
    %1851 = vmatpush1.msra.mxu0 %v1760
    %1852 = vmatprep.subr.mxu0 0.0
    %1853 = vmatpush1.msra.mxu0 %v1771
    %1854 = vmatprep.subr.mxu0 0.0
    %1855 = vmatpush1.msra.mxu0 %v1772
    %1856 = vmatprep.subr.mxu0 0.0
    %1857 = vmatpush1.msra.mxu0 %v1777
    %1858 = vmatprep.subr.mxu0 0.0
    %1859 = vmatpush1.msra.mxu0 %v1778
    %1860 = vmatprep.subr.mxu0 0.0
    %1861 = vmatpush1.msra.mxu0 0.0
    %1862 = vmatprep.subr.mxu0 0.0
    %1863 = vmatpush1.msra.mxu0 0.0
    %1864 = vmatprep.subr.mxu0 0.0
    %1865 = vmatpush1.msra.mxu0 0.0
    %1866 = vmatprep.subr.mxu0 0.0
    %1867 = vmatpush1.msra.mxu0 0.0
    %1868 = vmatprep.subr.mxu0 0.0
    %1869 = vmatpush1.msra.mxu0 0.0
    %1870 = vmatprep.subr.mxu0 0.0
    %1871 = vmatpush1.msra.mxu0 0.0
    %1872 = vmatprep.subr.mxu0 0.0
    %1873 = vmatpush1.msra.mxu0 0.0
    %1874 = vmatprep.subr.mxu0 0.0
    %1875 = vmatpush1.msra.mxu0 0.0
    %1876 = vmatprep.subr.mxu0 0.0
    %1877 = vmatpush1.msra.mxu0 0.0
    %1878 = vmatprep.subr.mxu0 0.0
    %1879 = vmatpush1.msra.mxu0 0.0
    %1880 = vmatprep.subr.mxu0 0.0
    %1881 = vmatpush1.msra.mxu0 0.0
    %1882 = vmatprep.subr.mxu0 0.0
    %1883 = vmatpush1.msra.mxu0 0.0
    %1884 = vmatprep.subr.mxu0 0.0
    %1885 = vmatpush1.msra.mxu0 0.0
    %1886 = vmatprep.subr.mxu0 0.0
    %1887 = vmatpush1.msra.mxu0 0.0
    %1888 = vmatprep.subr.mxu0 0.0
    %1889 = vmatpush1.msra.mxu0 0.0
    %1890 = vmatprep.subr.mxu0 0.0
    %1891 = vmatpush1.msra.mxu0 0.0
    %1892 = vmatprep.subr.mxu0 0.0
    %1893 = vmatpush1.msra.mxu0 0.0
    %1894 = vmatprep.subr.mxu0 0.0
    %1895 = vmatpush1.msra.mxu0 0.0
    %1896 = vmatprep.subr.mxu0 0.0
    %1897 = vmatpush1.msra.mxu0 0.0
    %1898 = vmatprep.subr.mxu0 0.0
    %1899 = vmatpush1.msra.mxu0 0.0
    %1900 = vmatprep.subr.mxu0 0.0
    %1901 = vmatpush1.msra.mxu0 0.0
    %1902 = vmatprep.subr.mxu0 0.0
    %1903 = vmatpush1.msra.mxu0 0.0
    %1904 = vmatprep.subr.mxu0 0.0
    %1905 = vmatpush1.msra.mxu0 0.0
    %1906 = vmatprep.subr.mxu0 0.0
    %1907 = vmatpush1.msra.mxu0 0.0
    %1908 = vmatprep.mubr.f32.mxu0 0.0
    %1909 = vmatmul.mubr.f32.gmra.mrb[0].mxu0 %v1833
    %v1910 = vpop.f32.mrb[0].mxu0
    %v1911 = vadd.f32 %v1814, %v1910
    %v1912 = vpop.f32.mrb[0].mxu0
    %1913 = vmatprep.mubr.f32.mxu0 0.0
    %1914 = vmatmul.mubr.f32.gmra.mrb[0].mxu0 %v1836
    %v1915 = vpop.f32.mrb[0].mxu0
    %v1916 = vadd.f32 %v1819, %v1915
    %v1917 = vpop.f32.mrb[0].mxu0
    %1918 = vmatprep.mubr.f32.mxu0 0.0
    %1919 = vmatmul.mubr.f32.gmra.mrb[0].mxu0 %v1839
    %v1920 = vpop.f32.mrb[0].mxu0
    %v1921 = vadd.f32 %v1824, %v1920
    %v1922 = vpop.f32.mrb[0].mxu0
    %1923 = vmatprep.mubr.f32.mxu0 0.0
    %1924 = vmatmul.mubr.f32.gmra.mrb[0].mxu0 %v1842
    %v1925 = vpop.f32.mrb[0].mxu0
    %v1926 = vadd.f32 %v1829, %v1925
    %v1927 = vpop.f32.mrb[0].mxu0
    %1928 = vdwg.mxu0
    %v1929 = vmax.f32 %v1911, 0.0
    %v1930 = vmax.f32 %v1916, 0.0
    %v1931 = vmax.f32 %v1921, 0.0
    %v1932 = vmax.f32 %v1926, 0.0
    %1933 = vmatprep.subr.mxu0 0.0
    %1934 = vmatpush1.msra.mxu0 %v1759
    %1935 = vmatprep.subr.mxu0 0.0
    %1936 = vmatpush1.msra.mxu0 %v1760
    %1937 = vmatprep.subr.mxu0 0.0
    %1938 = vmatpush1.msra.mxu0 %v1765
    %1939 = vmatprep.subr.mxu0 0.0
    %1940 = vmatpush1.msra.mxu0 %v1766
    %1941 = vmatprep.subr.mxu0 0.0
    %1942 = vmatpush1.msra.mxu0 %v1777
    %1943 = vmatprep.subr.mxu0 0.0
    %1944 = vmatpush1.msra.mxu0 %v1778
    %1945 = vmatprep.subr.mxu0 0.0
    %1946 = vmatpush1.msra.mxu0 %v1783
    %1947 = vmatprep.subr.mxu0 0.0
    %1948 = vmatpush1.msra.mxu0 %v1784
    %1949 = vmatprep.subr.mxu0 0.0
    %1950 = vmatpush1.msra.mxu0 0.0
    %1951 = vmatprep.subr.mxu0 0.0
    %1952 = vmatpush1.msra.mxu0 0.0
    %1953 = vmatprep.subr.mxu0 0.0
    %1954 = vmatpush1.msra.mxu0 0.0
    %1955 = vmatprep.subr.mxu0 0.0
    %1956 = vmatpush1.msra.mxu0 0.0
    %1957 = vmatprep.subr.mxu0 0.0
    %1958 = vmatpush1.msra.mxu0 0.0
    %1959 = vmatprep.subr.mxu0 0.0
    %1960 = vmatpush1.msra.mxu0 0.0
    %1961 = vmatprep.subr.mxu0 0.0
    %1962 = vmatpush1.msra.mxu0 0.0
    %1963 = vmatprep.subr.mxu0 0.0
    %1964 = vmatpush1.msra.mxu0 0.0
    %1965 = vmatprep.subr.mxu0 0.0
    %1966 = vmatpush1.msra.mxu0 0.0
    %1967 = vmatprep.subr.mxu0 0.0
    %1968 = vmatpush1.msra.mxu0 0.0
    %1969 = vmatprep.subr.mxu0 0.0
    %1970 = vmatpush1.msra.mxu0 0.0
    %1971 = vmatprep.subr.mxu0 0.0
    %1972 = vmatpush1.msra.mxu0 0.0
    %1973 = vmatprep.subr.mxu0 0.0
    %1974 = vmatpush1.msra.mxu0 0.0
    %1975 = vmatprep.subr.mxu0 0.0
    %1976 = vmatpush1.msra.mxu0 0.0
    %1977 = vmatprep.subr.mxu0 0.0
    %1978 = vmatpush1.msra.mxu0 0.0
    %1979 = vmatprep.subr.mxu0 0.0
    %1980 = vmatpush1.msra.mxu0 0.0
    %1981 = vmatprep.subr.mxu0 0.0
    %1982 = vmatpush1.msra.mxu0 0.0
    %1983 = vmatprep.subr.mxu0 0.0
    %1984 = vmatpush1.msra.mxu0 0.0
    %1985 = vmatprep.subr.mxu0 0.0
    %1986 = vmatpush1.msra.mxu0 0.0
    %1987 = vmatprep.subr.mxu0 0.0
    %1988 = vmatpush1.msra.mxu0 0.0
    %1989 = vmatprep.subr.mxu0 0.0
    %1990 = vmatpush1.msra.mxu0 0.0
    %1991 = vmatprep.subr.mxu0 0.0
    %1992 = vmatpush1.msra.mxu0 0.0
    %1993 = vmatprep.subr.mxu0 0.0
    %1994 = vmatpush1.msra.mxu0 0.0
    %1995 = vmatprep.subr.mxu0 0.0
    %1996 = vmatpush1.msra.mxu0 0.0
    %1997 = vmatprep.mubr.f32.mxu0 0.0
    %1998 = vmatmul.mubr.f32.gmra.mrb[0].mxu0 %v1833
    %v1999 = vpop.f32.mrb[0].mxu0
    %v2000 = vadd.f32 %v1814, %v1999
    %v2001 = vpop.f32.mrb[0].mxu0
    %2002 = vmatprep.mubr.f32.mxu0 0.0
    %2003 = vmatmul.mubr.f32.gmra.mrb[0].mxu0 %v1836
    %v2004 = vpop.f32.mrb[0].mxu0
    %v2005 = vadd.f32 %v1819, %v2004
    %v2006 = vpop.f32.mrb[0].mxu0
    %2007 = vmatprep.mubr.f32.mxu0 0.0
    %2008 = vmatmul.mubr.f32.gmra.mrb[0].mxu0 %v1839
    %v2009 = vpop.f32.mrb[0].mxu0
    %v2010 = vadd.f32 %v1824, %v2009
    %v2011 = vpop.f32.mrb[0].mxu0
    %2012 = vmatprep.mubr.f32.mxu0 0.0
    %2013 = vmatmul.mubr.f32.gmra.mrb[0].mxu0 %v1842
    %v2014 = vpop.f32.mrb[0].mxu0
    %v2015 = vadd.f32 %v1829, %v2014
    %v2016 = vpop.f32.mrb[0].mxu0
    %2017 = vdwg.mxu0
    %v2018 = vmax.f32 %v2000, 0.0
    %v2019 = vmax.f32 %v2005, 0.0
    %v2020 = vmax.f32 %v2010, 0.0
    %v2021 = vmax.f32 %v2015, 0.0
    %2022 = vmatprep.subr.mxu0 0.0
    %2023 = vmatpush1.msra.mxu0 %v1771
    %2024 = vmatprep.subr.mxu0 0.0
    %2025 = vmatpush1.msra.mxu0 %v1772
    %2026 = vmatprep.subr.mxu0 0.0
    %2027 = vmatpush1.msra.mxu0 %v1777
    %2028 = vmatprep.subr.mxu0 0.0
    %2029 = vmatpush1.msra.mxu0 %v1778
    %2030 = vmatprep.subr.mxu0 0.0
    %2031 = vmatpush1.msra.mxu0 %v1789
    %2032 = vmatprep.subr.mxu0 0.0
    %2033 = vmatpush1.msra.mxu0 %v1790
    %2034 = vmatprep.subr.mxu0 0.0
    %2035 = vmatpush1.msra.mxu0 %v1795
    %2036 = vmatprep.subr.mxu0 0.0
    %2037 = vmatpush1.msra.mxu0 %v1796
    %2038 = vmatprep.subr.mxu0 0.0
    %2039 = vmatpush1.msra.mxu0 0.0
    %2040 = vmatprep.subr.mxu0 0.0
    %2041 = vmatpush1.msra.mxu0 0.0
    %2042 = vmatprep.subr.mxu0 0.0
    %2043 = vmatpush1.msra.mxu0 0.0
    %2044 = vmatprep.subr.mxu0 0.0
    %2045 = vmatpush1.msra.mxu0 0.0
    %2046 = vmatprep.subr.mxu0 0.0
    %2047 = vmatpush1.msra.mxu0 0.0
    %2048 = vmatprep.subr.mxu0 0.0
    %2049 = vmatpush1.msra.mxu0 0.0
    %2050 = vmatprep.subr.mxu0 0.0
    %2051 = vmatpush1.msra.mxu0 0.0
    %2052 = vmatprep.subr.mxu0 0.0
    %2053 = vmatpush1.msra.mxu0 0.0
    %2054 = vmatprep.subr.mxu0 0.0
    %2055 = vmatpush1.msra.mxu0 0.0
    %2056 = vmatprep.subr.mxu0 0.0
    %2057 = vmatpush1.msra.mxu0 0.0
    %2058 = vmatprep.subr.mxu0 0.0
    %2059 = vmatpush1.msra.mxu0 0.0
    %2060 = vmatprep.subr.mxu0 0.0
    %2061 = vmatpush1.msra.mxu0 0.0
    %2062 = vmatprep.subr.mxu0 0.0
    %2063 = vmatpush1.msra.mxu0 0.0
    %2064 = vmatprep.subr.mxu0 0.0
    %2065 = vmatpush1.msra.mxu0 0.0
    %2066 = vmatprep.subr.mxu0 0.0
    %2067 = vmatpush1.msra.mxu0 0.0
    %2068 = vmatprep.subr.mxu0 0.0
    %2069 = vmatpush1.msra.mxu0 0.0
    %2070 = vmatprep.subr.mxu0 0.0
    %2071 = vmatpush1.msra.mxu0 0.0
    %2072 = vmatprep.subr.mxu0 0.0
    %2073 = vmatpush1.msra.mxu0 0.0
    %2074 = vmatprep.subr.mxu0 0.0
    %2075 = vmatpush1.msra.mxu0 0.0
    %2076 = vmatprep.subr.mxu0 0.0
    %2077 = vmatpush1.msra.mxu0 0.0
    %2078 = vmatprep.subr.mxu0 0.0
    %2079 = vmatpush1.msra.mxu0 0.0
    %2080 = vmatprep.subr.mxu0 0.0
    %2081 = vmatpush1.msra.mxu0 0.0
    %2082 = vmatprep.subr.mxu0 0.0
    %2083 = vmatpush1.msra.mxu0 0.0
    %2084 = vmatprep.subr.mxu0 0.0
    %2085 = vmatpush1.msra.mxu0 0.0
    %2086 = vmatprep.mubr.f32.mxu0 0.0
    %2087 = vmatmul.mubr.f32.gmra.mrb[0].mxu0 %v1833
    %v2088 = vpop.f32.mrb[0].mxu0
    %v2089 = vadd.f32 %v1814, %v2088
    %v2090 = vpop.f32.mrb[0].mxu0
    %2091 = vmatprep.mubr.f32.mxu0 0.0
    %2092 = vmatmul.mubr.f32.gmra.mrb[0].mxu0 %v1836
    %v2093 = vpop.f32.mrb[0].mxu0
    %v2094 = vadd.f32 %v1819, %v2093
    %v2095 = vpop.f32.mrb[0].mxu0
    %2096 = vmatprep.mubr.f32.mxu0 0.0
    %2097 = vmatmul.mubr.f32.gmra.mrb[0].mxu0 %v1839
    %v2098 = vpop.f32.mrb[0].mxu0
    %v2099 = vadd.f32 %v1824, %v2098
    %v2100 = vpop.f32.mrb[0].mxu0
    %2101 = vmatprep.mubr.f32.mxu0 0.0
    %2102 = vmatmul.mubr.f32.gmra.mrb[0].mxu0 %v1842
    %v2103 = vpop.f32.mrb[0].mxu0
    %v2104 = vadd.f32 %v1829, %v2103
    %v2105 = vpop.f32.mrb[0].mxu0
    %2106 = vdwg.mxu0
    %v2107 = vmax.f32 %v2089, 0.0
    %v2108 = vmax.f32 %v2094, 0.0
    %v2109 = vmax.f32 %v2099, 0.0
    %v2110 = vmax.f32 %v2104, 0.0
    %2111 = vmatprep.subr.mxu0 0.0
    %2112 = vmatpush1.msra.mxu0 %v1777
    %2113 = vmatprep.subr.mxu0 0.0
    %2114 = vmatpush1.msra.mxu0 %v1778
    %2115 = vmatprep.subr.mxu0 0.0
    %2116 = vmatpush1.msra.mxu0 %v1783
    %2117 = vmatprep.subr.mxu0 0.0
    %2118 = vmatpush1.msra.mxu0 %v1784
    %2119 = vmatprep.subr.mxu0 0.0
    %2120 = vmatpush1.msra.mxu0 %v1795
    %2121 = vmatprep.subr.mxu0 0.0
    %2122 = vmatpush1.msra.mxu0 %v1796
    %2123 = vmatprep.subr.mxu0 0.0
    %2124 = vmatpush1.msra.mxu0 %v1801
    %2125 = vmatprep.subr.mxu0 0.0
    %2126 = vmatpush1.msra.mxu0 %v1802
    %2127 = vmatprep.subr.mxu0 0.0
    %2128 = vmatpush1.msra.mxu0 0.0
    %2129 = vmatprep.subr.mxu0 0.0
    %2130 = vmatpush1.msra.mxu0 0.0
    %2131 = vmatprep.subr.mxu0 0.0
    %2132 = vmatpush1.msra.mxu0 0.0
    %2133 = vmatprep.subr.mxu0 0.0
    %2134 = vmatpush1.msra.mxu0 0.0
    %2135 = vmatprep.subr.mxu0 0.0
    %2136 = vmatpush1.msra.mxu0 0.0
    %2137 = vmatprep.subr.mxu0 0.0
    %2138 = vmatpush1.msra.mxu0 0.0
    %2139 = vmatprep.subr.mxu0 0.0
    %2140 = vmatpush1.msra.mxu0 0.0
    %2141 = vmatprep.subr.mxu0 0.0
    %2142 = vmatpush1.msra.mxu0 0.0
    %2143 = vmatprep.subr.mxu0 0.0
    %2144 = vmatpush1.msra.mxu0 0.0
    %2145 = vmatprep.subr.mxu0 0.0
    %2146 = vmatpush1.msra.mxu0 0.0
    %2147 = vmatprep.subr.mxu0 0.0
    %2148 = vmatpush1.msra.mxu0 0.0
    %2149 = vmatprep.subr.mxu0 0.0
    %2150 = vmatpush1.msra.mxu0 0.0
    %2151 = vmatprep.subr.mxu0 0.0
    %2152 = vmatpush1.msra.mxu0 0.0
    %2153 = vmatprep.subr.mxu0 0.0
    %2154 = vmatpush1.msra.mxu0 0.0
    %2155 = vmatprep.subr.mxu0 0.0
    %2156 = vmatpush1.msra.mxu0 0.0
    %2157 = vmatprep.subr.mxu0 0.0
    %2158 = vmatpush1.msra.mxu0 0.0
    %2159 = vmatprep.subr.mxu0 0.0
    %2160 = vmatpush1.msra.mxu0 0.0
    %2161 = vmatprep.subr.mxu0 0.0
    %2162 = vmatpush1.msra.mxu0 0.0
    %2163 = vmatprep.subr.mxu0 0.0
    %2164 = vmatpush1.msra.mxu0 0.0
    %2165 = vmatprep.subr.mxu0 0.0
    %2166 = vmatpush1.msra.mxu0 0.0
    %2167 = vmatprep.subr.mxu0 0.0
    %2168 = vmatpush1.msra.mxu0 0.0
    %2169 = vmatprep.subr.mxu0 0.0
    %2170 = vmatpush1.msra.mxu0 0.0
    %2171 = vmatprep.subr.mxu0 0.0
    %2172 = vmatpush1.msra.mxu0 0.0
    %2173 = vmatprep.subr.mxu0 0.0
    %2174 = vmatpush1.msra.mxu0 0.0
    %2175 = vmatprep.mubr.f32.mxu0 0.0
    %2176 = vmatmul.mubr.f32.gmra.mrb[0].mxu0 %v1833
    %v2177 = vpop.f32.mrb[0].mxu0
    %v2178 = vadd.f32 %v1814, %v2177
    %v2179 = vpop.f32.mrb[0].mxu0
    %2180 = vmatprep.mubr.f32.mxu0 0.0
    %2181 = vmatmul.mubr.f32.gmra.mrb[0].mxu0 %v1836
    %v2182 = vpop.f32.mrb[0].mxu0
    %v2183 = vadd.f32 %v1819, %v2182
    %v2184 = vpop.f32.mrb[0].mxu0
    %2185 = vmatprep.mubr.f32.mxu0 0.0
    %2186 = vmatmul.mubr.f32.gmra.mrb[0].mxu0 %v1839
    %v2187 = vpop.f32.mrb[0].mxu0
    %v2188 = vadd.f32 %v1824, %v2187
    %v2189 = vpop.f32.mrb[0].mxu0
    %2190 = vmatprep.mubr.f32.mxu0 0.0
    %2191 = vmatmul.mubr.f32.gmra.mrb[0].mxu0 %v1842
    %v2192 = vpop.f32.mrb[0].mxu0
    %v2193 = vadd.f32 %v1829, %v2192
    %v2194 = vpop.f32.mrb[0].mxu0
    %2195 = vdwg.mxu0
    %v2196 = vmax.f32 %v2178, 0.0
    %v2197 = vmax.f32 %v2183, 0.0
    %v2198 = vmax.f32 %v2188, 0.0
    %v2199 = vmax.f32 %v2193, 0.0
    %v2200 = vld [vmem:[%s5] sm:$0xff]
    %v2201 = vld [vmem:[%s5 + $0x8] sm:$0xff]
    %v2202 = vld [vmem:[%s5 + $0x10] sm:$0xff]
    %v2203 = vld [vmem:[%s5 + $0x18] sm:$0xff]
    %v2204 = vld [vmem:[%s5 + $0x20] sm:$0xff]
    %v2205 = vld [vmem:[%s5 + $0x28] sm:$0xff]
    %v2206 = vld [vmem:[%s5 + $0x30] sm:$0xff]
    %v2207 = vld [vmem:[%s5 + $0x38] sm:$0xff]
    %v2208 = vld [vmem:[%s6] sm:$0xff]
    %v2209 = vld [vmem:[%s6 + $0x8] sm:$0xff]
    %v2210 = vld [vmem:[%s6 + $0x10] sm:$0xff]
    %v2211 = vld [vmem:[%s6 + $0x18] sm:$0xff]
    %v2212 = vld [vmem:[%s6 + $0x20] sm:$0xff]
    %v2213 = vld [vmem:[%s6 + $0x28] sm:$0xff]
    %v2214 = vld [vmem:[%s6 + $0x30] sm:$0xff]
    %v2215 = vld [vmem:[%s6 + $0x38] sm:$0xff]
    %2217 = vset.pattern.permute.xlu0 0
    %2218 = vperm.xlu0 %2217, %v2208
    %v2219 = vpop.permute.xlu0 %2218
    %2222 = vset.pattern.permute.xlu0 0
    %2223 = vperm.xlu0 %2222, %v2209
    %v2224 = vpop.permute.xlu0 %2223
    %2227 = vset.pattern.permute.xlu0 0
    %2228 = vperm.xlu0 %2227, %v2210
    %v2229 = vpop.permute.xlu0 %2228
    %2232 = vset.pattern.permute.xlu0 0
    %2233 = vperm.xlu0 %2232, %v2211
    %v2234 = vpop.permute.xlu0 %2233
    %2237 = vset.pattern.permute.xlu0 0
    %2238 = vperm.xlu0 %2237, %v2212
    %v2239 = vpop.permute.xlu0 %2238
    %2242 = vset.pattern.permute.xlu0 0
    %2243 = vperm.xlu0 %2242, %v2213
    %v2244 = vpop.permute.xlu0 %2243
    %2247 = vset.pattern.permute.xlu0 0
    %2248 = vperm.xlu0 %2247, %v2214
    %v2249 = vpop.permute.xlu0 %2248
    %2252 = vset.pattern.permute.xlu0 0
    %2253 = vperm.xlu0 %2252, %v2215
    %v2254 = vpop.permute.xlu0 %2253
    %2256 = vmatprep.subr.mxu0 0.0
    %2257 = vmatpush1.msra.mxu0 %v1929
    %2258 = vmatprep.subr.mxu0 0.0
    %2259 = vmatpush1.msra.mxu0 %v1930
    %2260 = vmatprep.subr.mxu0 0.0
    %2261 = vmatpush1.msra.mxu0 %v1931
    %2262 = vmatprep.subr.mxu0 0.0
    %2263 = vmatpush1.msra.mxu0 %v1932
    %2264 = vmatprep.subr.mxu0 0.0
    %2265 = vmatpush1.msra.mxu0 %v2018
    %2266 = vmatprep.subr.mxu0 0.0
    %2267 = vmatpush1.msra.mxu0 %v2019
    %2268 = vmatprep.subr.mxu0 0.0
    %2269 = vmatpush1.msra.mxu0 %v2020
    %2270 = vmatprep.subr.mxu0 0.0
    %2271 = vmatpush1.msra.mxu0 %v2021
    %2272 = vmatprep.subr.mxu0 0.0
    %2273 = vmatpush1.msra.mxu0 %v2107
    %2274 = vmatprep.subr.mxu0 0.0
    %2275 = vmatpush1.msra.mxu0 %v2108
    %2276 = vmatprep.subr.mxu0 0.0
    %2277 = vmatpush1.msra.mxu0 %v2109
    %2278 = vmatprep.subr.mxu0 0.0
    %2279 = vmatpush1.msra.mxu0 %v2110
    %2280 = vmatprep.subr.mxu0 0.0
    %2281 = vmatpush1.msra.mxu0 %v2196
    %2282 = vmatprep.subr.mxu0 0.0
    %2283 = vmatpush1.msra.mxu0 %v2197
    %2284 = vmatprep.subr.mxu0 0.0
    %2285 = vmatpush1.msra.mxu0 %v2198
    %2286 = vmatprep.subr.mxu0 0.0
    %2287 = vmatpush1.msra.mxu0 %v2199
    %2288 = vmatprep.subr.mxu0 0.0
    %2289 = vmatpush1.msra.mxu0 0.0
    %2290 = vmatprep.subr.mxu0 0.0
    %2291 = vmatpush1.msra.mxu0 0.0
    %2292 = vmatprep.subr.mxu0 0.0
    %2293 = vmatpush1.msra.mxu0 0.0
    %2294 = vmatprep.subr.mxu0 0.0
    %2295 = vmatpush1.msra.mxu0 0.0
    %2296 = vmatprep.subr.mxu0 0.0
    %2297 = vmatpush1.msra.mxu0 0.0
    %2298 = vmatprep.subr.mxu0 0.0
    %2299 = vmatpush1.msra.mxu0 0.0
    %2300 = vmatprep.subr.mxu0 0.0
    %2301 = vmatpush1.msra.mxu0 0.0
    %2302 = vmatprep.subr.mxu0 0.0
    %2303 = vmatpush1.msra.mxu0 0.0
    %2304 = vmatprep.subr.mxu0 0.0
    %2305 = vmatpush1.msra.mxu0 0.0
    %2306 = vmatprep.subr.mxu0 0.0
    %2307 = vmatpush1.msra.mxu0 0.0
    %2308 = vmatprep.subr.mxu0 0.0
    %2309 = vmatpush1.msra.mxu0 0.0
    %2310 = vmatprep.subr.mxu0 0.0
    %2311 = vmatpush1.msra.mxu0 0.0
    %2312 = vmatprep.subr.mxu0 0.0
    %2313 = vmatpush1.msra.mxu0 0.0
    %2314 = vmatprep.subr.mxu0 0.0
    %2315 = vmatpush1.msra.mxu0 0.0
    %2316 = vmatprep.subr.mxu0 0.0
    %2317 = vmatpush1.msra.mxu0 0.0
    %2318 = vmatprep.subr.mxu0 0.0
    %2319 = vmatpush1.msra.mxu0 0.0
    %2320 = vmatprep.mubr.f32.mxu0 0.0
    %2321 = vmatmul.mubr.f32.gmra.mrb[0].mxu0 %v2200
    %v2322 = vpop.f32.mrb[0].mxu0
    %v2323 = vadd.f32 %v2219, %v2322
    %v2324 = vpop.f32.mrb[0].mxu0
    %2325 = vmatprep.mubr.f32.mxu0 0.0
    %2326 = vmatmul.mubr.f32.gmra.mrb[0].mxu0 %v2201
    %v2327 = vpop.f32.mrb[0].mxu0
    %v2328 = vadd.f32 %v2224, %v2327
    %v2329 = vpop.f32.mrb[0].mxu0
    %2330 = vmatprep.mubr.f32.mxu0 0.0
    %2331 = vmatmul.mubr.f32.gmra.mrb[0].mxu0 %v2202
    %v2332 = vpop.f32.mrb[0].mxu0
    %v2333 = vadd.f32 %v2229, %v2332
    %v2334 = vpop.f32.mrb[0].mxu0
    %2335 = vmatprep.mubr.f32.mxu0 0.0
    %2336 = vmatmul.mubr.f32.gmra.mrb[0].mxu0 %v2203
    %v2337 = vpop.f32.mrb[0].mxu0
    %v2338 = vadd.f32 %v2234, %v2337
    %v2339 = vpop.f32.mrb[0].mxu0
    %2340 = vmatprep.mubr.f32.mxu0 0.0
    %2341 = vmatmul.mubr.f32.gmra.mrb[0].mxu0 %v2204
    %v2342 = vpop.f32.mrb[0].mxu0
    %v2343 = vadd.f32 %v2239, %v2342
    %v2344 = vpop.f32.mrb[0].mxu0
    %2345 = vmatprep.mubr.f32.mxu0 0.0
    %2346 = vmatmul.mubr.f32.gmra.mrb[0].mxu0 %v2205
    %v2347 = vpop.f32.mrb[0].mxu0
    %v2348 = vadd.f32 %v2244, %v2347
    %v2349 = vpop.f32.mrb[0].mxu0
    %2350 = vmatprep.mubr.f32.mxu0 0.0
    %2351 = vmatmul.mubr.f32.gmra.mrb[0].mxu0 %v2206
    %v2352 = vpop.f32.mrb[0].mxu0
    %v2353 = vadd.f32 %v2249, %v2352
    %v2354 = vpop.f32.mrb[0].mxu0
    %2355 = vmatprep.mubr.f32.mxu0 0.0
    %2356 = vmatmul.mubr.f32.gmra.mrb[0].mxu0 %v2207
    %v2357 = vpop.f32.mrb[0].mxu0
    %v2358 = vadd.f32 %v2254, %v2357
    %v2359 = vpop.f32.mrb[0].mxu0
    %2360 = vdwg.mxu0
    %v2361 = vmax.f32 %v2323, 0.0
    %v2362 = vmax.f32 %v2328, 0.0
    %v2363 = vmax.f32 %v2333, 0.0
    %v2364 = vmax.f32 %v2338, 0.0
    %v2365 = vmax.f32 %v2343, 0.0
    %v2366 = vmax.f32 %v2348, 0.0
    %v2367 = vmax.f32 %v2353, 0.0
    %v2368 = vmax.f32 %v2358, 0.0
    %v2369 = vld [vmem:[%s7] sm:$0xff]
    %v2370 = vld [vmem:[%s7 + $0x8] sm:$0xff]
    %v2371 = vld [vmem:[%s7 + $0x10] sm:$0xff]
    %v2372 = vld [vmem:[%s7 + $0x18] sm:$0xff]
    %v2373 = vld [vmem:[%s7 + $0x20] sm:$0xff]
    %v2374 = vld [vmem:[%s7 + $0x28] sm:$0xff]
    %v2375 = vld [vmem:[%s7 + $0x30] sm:$0xff]
    %v2376 = vld [vmem:[%s7 + $0x38] sm:$0xff]
    %v2377 = vld [vmem:[%s8] sm:$0xff]
    %v2378 = vld [vmem:[%s8 + $0x8] sm:$0xff]
    %v2379 = vld [vmem:[%s8 + $0x10] sm:$0xff]
    %v2380 = vld [vmem:[%s8 + $0x18] sm:$0xff]
    %v2381 = vld [vmem:[%s8 + $0x20] sm:$0xff]
    %v2382 = vld [vmem:[%s8 + $0x28] sm:$0xff]
    %v2383 = vld [vmem:[%s8 + $0x30] sm:$0xff]
    %v2384 = vld [vmem:[%s8 + $0x38] sm:$0xff]
    %2386 = vset.pattern.permute.xlu0 0
    %2387 = vperm.xlu0 %2386, %v2377
    %v2388 = vpop.permute.xlu0 %2387
    %2391 = vset.pattern.permute.xlu0 0
    %2392 = vperm.xlu0 %2391, %v2378
    %v2393 = vpop.permute.xlu0 %2392
    %2396 = vset.pattern.permute.xlu0 0
    %2397 = vperm.xlu0 %2396, %v2379
    %v2398 = vpop.permute.xlu0 %2397
    %2401 = vset.pattern.permute.xlu0 0
    %2402 = vperm.xlu0 %2401, %v2380
    %v2403 = vpop.permute.xlu0 %2402
    %2406 = vset.pattern.permute.xlu0 0
    %2407 = vperm.xlu0 %2406, %v2381
    %v2408 = vpop.permute.xlu0 %2407
    %2411 = vset.pattern.permute.xlu0 0
    %2412 = vperm.xlu0 %2411, %v2382
    %v2413 = vpop.permute.xlu0 %2412
    %2416 = vset.pattern.permute.xlu0 0
    %2417 = vperm.xlu0 %2416, %v2383
    %v2418 = vpop.permute.xlu0 %2417
    %2421 = vset.pattern.permute.xlu0 0
    %2422 = vperm.xlu0 %2421, %v2384
    %v2423 = vpop.permute.xlu0 %2422
    %v2426 = vsel %vm1831, %v2369, 0
    %v2429 = vsel %vm1831, %v2370, 0
    %v2432 = vsel %vm1831, %v2371, 0
    %v2435 = vsel %vm1831, %v2372, 0
    %v2438 = vsel %vm1831, %v2373, 0
    %v2441 = vsel %vm1831, %v2374, 0
    %v2444 = vsel %vm1831, %v2375, 0
    %v2447 = vsel %vm1831, %v2376, 0
    %2449 = vmatprep.subr.mxu0 0.0
    %2450 = vmatpush1.msra.mxu0 %v2361
    %2451 = vmatprep.subr.mxu0 0.0
    %2452 = vmatpush1.msra.mxu0 %v2362
    %2453 = vmatprep.subr.mxu0 0.0
    %2454 = vmatpush1.msra.mxu0 %v2363
    %2455 = vmatprep.subr.mxu0 0.0
    %2456 = vmatpush1.msra.mxu0 %v2364
    %2457 = vmatprep.subr.mxu0 0.0
    %2458 = vmatpush1.msra.mxu0 %v2365
    %2459 = vmatprep.subr.mxu0 0.0
    %2460 = vmatpush1.msra.mxu0 %v2366
    %2461 = vmatprep.subr.mxu0 0.0
    %2462 = vmatpush1.msra.mxu0 %v2367
    %2463 = vmatprep.subr.mxu0 0.0
    %2464 = vmatpush1.msra.mxu0 %v2368
    %2465 = vmatprep.subr.mxu0 0.0
    %2466 = vmatpush1.msra.mxu0 0.0
    %2467 = vmatprep.subr.mxu0 0.0
    %2468 = vmatpush1.msra.mxu0 0.0
    %2469 = vmatprep.subr.mxu0 0.0
    %2470 = vmatpush1.msra.mxu0 0.0
    %2471 = vmatprep.subr.mxu0 0.0
    %2472 = vmatpush1.msra.mxu0 0.0
    %2473 = vmatprep.subr.mxu0 0.0
    %2474 = vmatpush1.msra.mxu0 0.0
    %2475 = vmatprep.subr.mxu0 0.0
    %2476 = vmatpush1.msra.mxu0 0.0
    %2477 = vmatprep.subr.mxu0 0.0
    %2478 = vmatpush1.msra.mxu0 0.0
    %2479 = vmatprep.subr.mxu0 0.0
    %2480 = vmatpush1.msra.mxu0 0.0
    %2481 = vmatprep.subr.mxu0 0.0
    %2482 = vmatpush1.msra.mxu0 0.0
    %2483 = vmatprep.subr.mxu0 0.0
    %2484 = vmatpush1.msra.mxu0 0.0
    %2485 = vmatprep.subr.mxu0 0.0
    %2486 = vmatpush1.msra.mxu0 0.0
    %2487 = vmatprep.subr.mxu0 0.0
    %2488 = vmatpush1.msra.mxu0 0.0
    %2489 = vmatprep.subr.mxu0 0.0
    %2490 = vmatpush1.msra.mxu0 0.0
    %2491 = vmatprep.subr.mxu0 0.0
    %2492 = vmatpush1.msra.mxu0 0.0
    %2493 = vmatprep.subr.mxu0 0.0
    %2494 = vmatpush1.msra.mxu0 0.0
    %2495 = vmatprep.subr.mxu0 0.0
    %2496 = vmatpush1.msra.mxu0 0.0
    %2497 = vmatprep.subr.mxu0 0.0
    %2498 = vmatpush1.msra.mxu0 0.0
    %2499 = vmatprep.subr.mxu0 0.0
    %2500 = vmatpush1.msra.mxu0 0.0
    %2501 = vmatprep.subr.mxu0 0.0
    %2502 = vmatpush1.msra.mxu0 0.0
    %2503 = vmatprep.subr.mxu0 0.0
    %2504 = vmatpush1.msra.mxu0 0.0
    %2505 = vmatprep.subr.mxu0 0.0
    %2506 = vmatpush1.msra.mxu0 0.0
    %2507 = vmatprep.subr.mxu0 0.0
    %2508 = vmatpush1.msra.mxu0 0.0
    %2509 = vmatprep.subr.mxu0 0.0
    %2510 = vmatpush1.msra.mxu0 0.0
    %2511 = vmatprep.subr.mxu0 0.0
    %2512 = vmatpush1.msra.mxu0 0.0
    %2513 = vmatprep.mubr.f32.mxu0 0.0
    %2514 = vmatmul.mubr.f32.gmra.mrb[0].mxu0 %v2426
    %v2515 = vpop.f32.mrb[0].mxu0
    %v2516 = vadd.f32 %v2388, %v2515
    %v2517 = vpop.f32.mrb[0].mxu0
    %2518 = vmatprep.mubr.f32.mxu0 0.0
    %2519 = vmatmul.mubr.f32.gmra.mrb[0].mxu0 %v2429
    %v2520 = vpop.f32.mrb[0].mxu0
    %v2521 = vadd.f32 %v2393, %v2520
    %v2522 = vpop.f32.mrb[0].mxu0
    %2523 = vmatprep.mubr.f32.mxu0 0.0
    %2524 = vmatmul.mubr.f32.gmra.mrb[0].mxu0 %v2432
    %v2525 = vpop.f32.mrb[0].mxu0
    %v2526 = vadd.f32 %v2398, %v2525
    %v2527 = vpop.f32.mrb[0].mxu0
    %2528 = vmatprep.mubr.f32.mxu0 0.0
    %2529 = vmatmul.mubr.f32.gmra.mrb[0].mxu0 %v2435
    %v2530 = vpop.f32.mrb[0].mxu0
    %v2531 = vadd.f32 %v2403, %v2530
    %v2532 = vpop.f32.mrb[0].mxu0
    %2533 = vmatprep.mubr.f32.mxu0 0.0
    %2534 = vmatmul.mubr.f32.gmra.mrb[0].mxu0 %v2438
    %v2535 = vpop.f32.mrb[0].mxu0
    %v2536 = vadd.f32 %v2408, %v2535
    %v2537 = vpop.f32.mrb[0].mxu0
    %2538 = vmatprep.mubr.f32.mxu0 0.0
    %2539 = vmatmul.mubr.f32.gmra.mrb[0].mxu0 %v2441
    %v2540 = vpop.f32.mrb[0].mxu0
    %v2541 = vadd.f32 %v2413, %v2540
    %v2542 = vpop.f32.mrb[0].mxu0
    %2543 = vmatprep.mubr.f32.mxu0 0.0
    %2544 = vmatmul.mubr.f32.gmra.mrb[0].mxu0 %v2444
    %v2545 = vpop.f32.mrb[0].mxu0
    %v2546 = vadd.f32 %v2418, %v2545
    %v2547 = vpop.f32.mrb[0].mxu0
    %2548 = vmatprep.mubr.f32.mxu0 0.0
    %2549 = vmatmul.mubr.f32.gmra.mrb[0].mxu0 %v2447
    %v2550 = vpop.f32.mrb[0].mxu0
    %v2551 = vadd.f32 %v2423, %v2550
    %v2552 = vpop.f32.mrb[0].mxu0
    %2553 = vdwg.mxu0
    %v2554 = vtanh.pop %v2516
    %v2555 = vtanh.pop %v2521
    %v2556 = vtanh.pop %v2526
    %v2557 = vtanh.pop %v2531
    %v2558 = vtanh.pop %v2536
    %v2559 = vtanh.pop %v2541
    %v2560 = vtanh.pop %v2546
    %v2561 = vtanh.pop %v2551
    %v2562 = vld [vmem:[%s9] sm:$0xff]
    %v2563 = vld [vmem:[%s10] sm:$0xff]
    %2565 = vset.pattern.permute.xlu0 0
    %2566 = vperm.xlu0 %2565, %v2563
    %v2567 = vpop.permute.xlu0 %2566
    %v2570 = vsel %vm1831, %v2562, 0
    %2572 = vmatprep.subr.mxu0 0.0
    %2573 = vmatpush1.msra.mxu0 %v2554
    %2574 = vmatprep.subr.mxu0 0.0
    %2575 = vmatpush1.msra.mxu0 %v2555
    %2576 = vmatprep.subr.mxu0 0.0
    %2577 = vmatpush1.msra.mxu0 %v2556
    %2578 = vmatprep.subr.mxu0 0.0
    %2579 = vmatpush1.msra.mxu0 %v2557
    %2580 = vmatprep.subr.mxu0 0.0
    %2581 = vmatpush1.msra.mxu0 %v2558
    %2582 = vmatprep.subr.mxu0 0.0
    %2583 = vmatpush1.msra.mxu0 %v2559
    %2584 = vmatprep.subr.mxu0 0.0
    %2585 = vmatpush1.msra.mxu0 %v2560
    %2586 = vmatprep.subr.mxu0 0.0
    %2587 = vmatpush1.msra.mxu0 %v2561
    %2588 = vmatprep.subr.mxu0 0.0
    %2589 = vmatpush1.msra.mxu0 0.0
    %2590 = vmatprep.subr.mxu0 0.0
    %2591 = vmatpush1.msra.mxu0 0.0
    %2592 = vmatprep.subr.mxu0 0.0
    %2593 = vmatpush1.msra.mxu0 0.0
    %2594 = vmatprep.subr.mxu0 0.0
    %2595 = vmatpush1.msra.mxu0 0.0
    %2596 = vmatprep.subr.mxu0 0.0
    %2597 = vmatpush1.msra.mxu0 0.0
    %2598 = vmatprep.subr.mxu0 0.0
    %2599 = vmatpush1.msra.mxu0 0.0
    %2600 = vmatprep.subr.mxu0 0.0
    %2601 = vmatpush1.msra.mxu0 0.0
    %2602 = vmatprep.subr.mxu0 0.0
    %2603 = vmatpush1.msra.mxu0 0.0
    %2604 = vmatprep.subr.mxu0 0.0
    %2605 = vmatpush1.msra.mxu0 0.0
    %2606 = vmatprep.subr.mxu0 0.0
    %2607 = vmatpush1.msra.mxu0 0.0
    %2608 = vmatprep.subr.mxu0 0.0
    %2609 = vmatpush1.msra.mxu0 0.0
    %2610 = vmatprep.subr.mxu0 0.0
    %2611 = vmatpush1.msra.mxu0 0.0
    %2612 = vmatprep.subr.mxu0 0.0
    %2613 = vmatpush1.msra.mxu0 0.0
    %2614 = vmatprep.subr.mxu0 0.0
    %2615 = vmatpush1.msra.mxu0 0.0
    %2616 = vmatprep.subr.mxu0 0.0
    %2617 = vmatpush1.msra.mxu0 0.0
    %2618 = vmatprep.subr.mxu0 0.0
    %2619 = vmatpush1.msra.mxu0 0.0
    %2620 = vmatprep.subr.mxu0 0.0
    %2621 = vmatpush1.msra.mxu0 0.0
    %2622 = vmatprep.subr.mxu0 0.0
    %2623 = vmatpush1.msra.mxu0 0.0
    %2624 = vmatprep.subr.mxu0 0.0
    %2625 = vmatpush1.msra.mxu0 0.0
    %2626 = vmatprep.subr.mxu0 0.0
    %2627 = vmatpush1.msra.mxu0 0.0
    %2628 = vmatprep.subr.mxu0 0.0
    %2629 = vmatpush1.msra.mxu0 0.0
    %2630 = vmatprep.subr.mxu0 0.0
    %2631 = vmatpush1.msra.mxu0 0.0
    %2632 = vmatprep.subr.mxu0 0.0
    %2633 = vmatpush1.msra.mxu0 0.0
    %2634 = vmatprep.subr.mxu0 0.0
    %2635 = vmatpush1.msra.mxu0 0.0
    %2636 = vmatprep.mubr.f32.mxu0 0.0
    %2637 = vmatmul.mubr.f32.gmra.mrb[0].mxu0 %v2570
    %v2638 = vpop.f32.mrb[0].mxu0
    %v2639 = vadd.f32 %v2567, %v2638
    %v2640 = vpop.f32.mrb[0].mxu0
    %2641 = vdwg.mxu0
    %v2642 = vrot.slane %v2639, 4
    %v2643 = vmax.f32 %v2639, %v2642
    %v2644 = vrot.slane %v2643, 2
    %v2645 = vmax.f32 %v2643, %v2644
    %v2646 = vrot.slane %v2645, 1
    %v2647 = vmax.f32 %v2645, %v2646
    %v2648 = vsub.f32 %v2639, %v2647
    %v2649 = vmul.f32 %v2648, 1.442695
    %v2650 = vpow.pop %v2649
    %v2651 = vrot.slane %v2650, 4
    %v2652 = vadd.f32 %v2650, %v2651
    %v2653 = vrot.slane %v2652, 2
    %v2654 = vadd.f32 %v2652, %v2653
    %v2655 = vrot.slane %v2654, 1
    %v2656 = vadd.f32 %v2654, %v2655
    %v2657 = vlog2.pop %v2656
    %v2658 = vmul.f32 %v2657, 0.6931472
    %v2659 = vsub.f32 %v2648, %v2658
    %2660 = vst [vmem:[#allocation5] sm:$0xff] %v2659
    // Predicated region
    $region50: #{tpu_custom_call.1} parent=1 // pred_check
      _
    $region51: #{tpu_custom_call.1} parent=1 // pred_check_branch
      %2662 = sbr.rel (0) target = $region53
    $region52: #{tpu_custom_call.1} parent=1 // pred_region
      %s2664 = ssub.s32 128, 128
      %2665 = vsyncadd [#allocation4], %s2664
      %s2667 = sshll.u32 [#allocation5], 4
      %s2668 = int_to_ptr.vmem [resolvable:$true] %s2667
      %2670 = dma.vmem_to_hbm [thread:$0]  %s2668, 128, %s11, [#allocation4]
    $region53: #{tpu_custom_call.1} parent=1 // pred_fallthru
      _
    // Predicated region
    $region54: #{tpu_custom_call.1} parent=1 // pred_check
      _
    $region55: #{tpu_custom_call.1} parent=1 // pred_check_branch
      %2672 = sbr.rel (0) target = $region57
    $region56: #{tpu_custom_call.1} parent=1 // pred_region
      %2673 = dma.done [#allocation4], 128
    $region57: #{tpu_custom_call.1} parent=1 // pred_fallthru
      _
    %2674 = vsyncpa [#allocation3], 1
    %2675 = vsyncpa [#allocation4], 1

</llo_original>
